<compile_context>
chip_gen: v7x
topology: tpu7x:2x2x1
jax: 0.10.0
libtpu: 0.0.40
codegen_flags: <defaults>
</compile_context>

<pallas_src>
import functools

import jax
import jax.numpy as jnp
import numpy as np
from jax.experimental import pallas as pl
from jax.experimental.pallas import tpu as pltpu

_EPS = 1e-5


# -----------------------------------------------------------------------------
# Pallas kernel: one BasicBlock forward for a block of Nb batch elements.
# Inputs: n_parts padded bf16 feature maps (the fused channel concat),
# identity (f32), reordered conv1 weights, conv2 weights, packed BN scale/bias.
# -----------------------------------------------------------------------------
def _basic_block_kernel(*refs, H, W, n_parts, relu_last):
    part_refs = refs[:n_parts]
    xid_ref, w1_ref, w2_ref, sb_ref, out_ref, y1p_ref = refs[n_parts:]

    Nb = out_ref.shape[0]
    Cout = out_ref.shape[-1]
    M = Nb * H * W

    s1 = sb_ref[0:1, :]
    b1 = sb_ref[1:2, :]
    s2 = sb_ref[2:3, :]
    b2 = sb_ref[3:4, :]

    # ---- conv1: fused channel-concat + im2col -> ONE MXU matmul ----
    # Slab column order is (part, tap, channel-within-part); the wrapper
    # reorders w1's rows identically, so one dot covers the whole
    # concatenated conv1.  Slicing / leading-dim reshapes stay in f32 (layout
    # safe); the slab is cast to bf16 right before the dot (lossless: the
    # parts arrived as bf16).
    taps1 = []
    for pref in part_refs:
        Cp = pref.shape[-1]
        xp = pref[...].astype(jnp.float32)            # (Nb, H+2, W+2, Cp)
        for dy in range(3):
            for dx in range(3):
                taps1.append(xp[:, dy:dy + H, dx:dx + W, :].reshape(M, Cp))
    slab1 = jnp.concatenate(taps1, axis=-1).astype(jnp.bfloat16)   # (M, 9*Cin)
    acc1 = jnp.dot(slab1, w1_ref[...], preferred_element_type=jnp.float32)

    # BN1 + ReLU (f32 epilogue).
    y1 = jnp.maximum(acc1 * s1 + b1, 0.0)             # (M, Cout)

    # ---- re-pad y1 into scratch: only the halo strips are re-zeroed ----
    # (no cross-grid-step state -> safe under "parallel" batch semantics)
    y1p_ref[:, 0:1, :, :] = jnp.zeros((Nb, 1, W + 2, Cout), jnp.float32)
    y1p_ref[:, H + 1:H + 2, :, :] = jnp.zeros((Nb, 1, W + 2, Cout), jnp.float32)
    y1p_ref[:, :, 0:1, :] = jnp.zeros((Nb, H + 2, 1, Cout), jnp.float32)
    y1p_ref[:, :, W + 1:W + 2, :] = jnp.zeros((Nb, H + 2, 1, Cout), jnp.float32)
    y1p_ref[:, 1:1 + H, 1:1 + W, :] = y1.reshape(Nb, H, W, Cout)
    y1p = y1p_ref[...]                                # (Nb, H+2, W+2, Cout)

    # ---- conv2: same im2col trick, single matmul ----
    taps2 = [y1p[:, dy:dy + H, dx:dx + W, :].reshape(M, Cout)
             for dy in range(3) for dx in range(3)]
    slab2 = jnp.concatenate(taps2, axis=-1).astype(jnp.bfloat16)   # (M, 9*Cout)
    acc2 = jnp.dot(slab2, w2_ref[...], preferred_element_type=jnp.float32)

    # BN2 + residual (+ ReLU), all f32.
    out = acc2 * s2 + b2 + xid_ref[...].reshape(M, Cout)
    if relu_last:
        out = jnp.maximum(out, 0.0)
    out_ref[...] = out.reshape(Nb, H, W, Cout)


def _pick_batch_block(N, H, W, cin_total, cout,
                      budget_bytes=12 << 20, m_cap=4096):
    """Largest divisor of N whose per-step VMEM footprint fits the budget.

    Budget is conservative (fits under every chip's default scoped VMEM
    limit, incl. v5e's 16 MiB) and includes double-buffered inputs/outputs,
    the padded-y1 scratch and the in-kernel slab temporaries.
    """
    hp, wp = H + 2, W + 2
    m = H * W
    per_n = 0
    per_n += 2 * hp * wp * cin_total * 2          # padded parts, bf16, 2 bufs
    per_n += hp * wp * cin_total * 4              # f32 tap temporaries
    per_n += 2 * m * 9 * cin_total * 2 + m * 9 * cin_total * 4   # slab1 (+f32)
    per_n += hp * wp * cout * 4                   # y1p scratch
    per_n += m * 9 * cout * 2 + m * 9 * cout * 4  # slab2 (+f32)
    per_n += 4 * m * cout * 4                     # xid + out (2 bufs each)
    per_n += 4 * m * cout * 4                     # accs / epilogue temporaries

    best = 1
    for cand in range(1, N + 1):
        if N % cand:
            continue
        if cand * per_n <= budget_bytes and cand * H * W <= m_cap:
            best = cand
    return best


def basic_block_forward(parts, x_identity, p, remove_last_relu=False):
    """parts: list of (N, H+2, W+2, C) bf16 padded feature maps in channel-
    concat order (ancestors..., self); x_identity: (N, H, W, Cout) f32."""
    N, H, W, Cout = x_identity.shape
    n_parts = len(parts)
    part_c = [int(q.shape[-1]) for q in parts]
    Cin = sum(part_c)
    assert p['w1'].shape == (3, 3, Cin, Cout)

    # im2col weight layout, with rows reordered to the kernel's slab column
    # order: (part, tap, channel-within-part).  bf16 for the MXU.
    chunks, off = [], 0
    for c in part_c:
        chunks.append(p['w1'][:, :, off:off + c, :].reshape(9 * c, Cout))
        off += c
    w1 = jnp.concatenate(chunks, axis=0).astype(jnp.bfloat16)      # (9*Cin, Cout)
    w2 = p['w2'].astype(jnp.bfloat16).reshape(9 * Cout, Cout)

    # Eval-mode BN folded into per-channel scale/bias, packed as one operand.
    s1 = p['bn1_gamma'] / jnp.sqrt(p['bn1_var'] + _EPS)
    b1 = p['bn1_beta'] - p['bn1_mean'] * s1
    s2 = p['bn2_gamma'] / jnp.sqrt(p['bn2_var'] + _EPS)
    b2 = p['bn2_beta'] - p['bn2_mean'] * s2
    sb = jnp.stack([s1, b1, s2, b2]).astype(jnp.float32)           # (4, Cout)

    Nb = _pick_batch_block(N, H, W, Cin, Cout)
    grid = (N // Nb,)

    kernel = functools.partial(_basic_block_kernel, H=H, W=W,
                               n_parts=n_parts,
                               relu_last=not remove_last_relu)

    part_specs = [pl.BlockSpec((Nb, H + 2, W + 2, c), lambda n: (n, 0, 0, 0))
                  for c in part_c]

    return pl.pallas_call(
        kernel,
        out_shape=jax.ShapeDtypeStruct((N, H, W, Cout), jnp.float32),
        grid_spec=pltpu.PrefetchScalarGridSpec(
            num_scalar_prefetch=0,
            grid=grid,
            in_specs=part_specs + [
                pl.BlockSpec((Nb, H, W, Cout), lambda n: (n, 0, 0, 0)),
                pl.BlockSpec((9 * Cin, Cout), lambda n: (0, 0)),
                pl.BlockSpec((9 * Cout, Cout), lambda n: (0, 0)),
                pl.BlockSpec((4, Cout), lambda n: (0, 0)),
            ],
            out_specs=pl.BlockSpec((Nb, H, W, Cout), lambda n: (n, 0, 0, 0)),
            scratch_shapes=[pltpu.VMEM((Nb, H + 2, W + 2, Cout), jnp.float32)],
        ),
        compiler_params=pltpu.CompilerParams(
            dimension_semantics=("parallel",)),   # batch blocks independent
    )(*parts, x_identity, w1, w2, sb)


# -----------------------------------------------------------------------------
# ModuleGroup (module_type='BasicBlock') in JAX.  Parameter bookkeeping and
# the task topology are host/glue code; the per-task channel concat is fused
# into the Pallas BasicBlock kernel above.
# -----------------------------------------------------------------------------
class ModuleGroupPallas:
    def __init__(self, task_info, planes, key, connect=True,
                 remove_last_relu=False):
        self.task_info = task_info
        self.connect = connect
        self.planes = planes
        self.remove_last_relu = remove_last_relu
        self.params = []
        for ti in task_info:
            if connect:
                n_anc = sum(1 for tj in task_info
                            if tj['parent_node'] in ti['ancestor_tasks'])
            else:
                n_anc = 0
            inplanes = (n_anc + 1) * planes
            key, sub = jax.random.split(key)
            self.params.append(self._init_block(sub, inplanes, planes))

    @staticmethod
    def _init_block(key, inplanes, planes):
        ks = jax.random.split(key, 8)
        std = (2.0 / (9 * planes)) ** 0.5   # kaiming_normal_ fan_out for 3x3
        return dict(
            w1=jax.random.normal(ks[0], (3, 3, inplanes, planes), jnp.float32) * std,
            w2=jax.random.normal(ks[1], (3, 3, planes, planes), jnp.float32) * std,
            bn1_gamma=jax.random.uniform(ks[2], (planes,), jnp.float32, 0.5, 1.5),
            bn1_beta=jax.random.normal(ks[3], (planes,), jnp.float32) * 0.1,
            bn1_mean=jax.random.normal(ks[4], (planes,), jnp.float32) * 0.1,
            bn1_var=jax.random.uniform(ks[5], (planes,), jnp.float32, 0.5, 1.5),
            bn2_gamma=jax.random.uniform(ks[6], (planes,), jnp.float32, 0.5, 1.5),
            bn2_beta=jax.random.normal(ks[7], (planes,), jnp.float32) * 0.1,
            bn2_mean=jnp.zeros((planes,), jnp.float32),
            bn2_var=jnp.ones((planes,), jnp.float32),
        )

    def _feature_cat_indices(self, k):
        anc = self.task_info[k]['ancestor_tasks']
        return [j for j in range(len(self.task_info))
                if self.task_info[j]['parent_node'] in anc]

    def forward(self, x_list):
        assert len(self.params) == len(x_list)
        # Pad + bf16-cast each feature map ONCE; shared by every task that
        # consumes it.  The concatenated cx tensor never hits HBM.
        padded = [jnp.pad(x, ((0, 0), (1, 1), (1, 1), (0, 0))).astype(jnp.bfloat16)
                  for x in x_list]
        out = []
        for k in range(len(self.params)):
            idx = self._feature_cat_indices(k) if self.connect else []
            parts = [padded[j] for j in idx] + [padded[k]]
            out.append(basic_block_forward(parts, x_list[k], self.params[k],
                                           remove_last_relu=self.remove_last_relu))
        return out


# -----------------------------------------------------------------------------
# Reference (lax.conv) with the same bf16 quantization points as the kernel.
# -----------------------------------------------------------------------------
def _ref_basic_block(cx, x, p, remove_last_relu=False):
    dn = ('NHWC', 'HWIO', 'NHWC')
    s1 = p['bn1_gamma'] / jnp.sqrt(p['bn1_var'] + _EPS)
    b1 = p['bn1_beta'] - p['bn1_mean'] * s1
    s2 = p['bn2_gamma'] / jnp.sqrt(p['bn2_var'] + _EPS)
    b2 = p['bn2_beta'] - p['bn2_mean'] * s2
    y = jax.lax.conv_general_dilated(
        cx.astype(jnp.bfloat16), p['w1'].astype(jnp.bfloat16),
        (1, 1), 'SAME', dimension_numbers=dn,
        preferred_element_type=jnp.float32)
    y = jnp.maximum(y * s1 + b1, 0.0)
    y = jax.lax.conv_general_dilated(
        y.astype(jnp.bfloat16), p['w2'].astype(jnp.bfloat16),
        (1, 1), 'SAME', dimension_numbers=dn,
        preferred_element_type=jnp.float32)
    y = y * s2 + b2 + x
    if not remove_last_relu:
        y = jnp.maximum(y, 0.0)
    return y


if __name__ == "__main__":
    key = jax.random.PRNGKey(0)
    N, H, W, C = 2, 8, 8, 8        # per-task feature maps, NHWC

    # Synthetic task_info (replaces the pandas DataFrame in the original).
    task_info = [
        {'parent_node': 't0', 'ancestor_tasks': []},
        {'parent_node': 't1', 'ancestor_tasks': ['t0']},
        {'parent_node': 't2', 'ancestor_tasks': ['t0', 't1']},
    ]

    key, kp = jax.random.split(key)
    group = ModuleGroupPallas(task_info, planes=C, key=kp, connect=True)

    x_list = []
    for _ in range(len(task_info)):
        key, kx = jax.random.split(key)
        x_list.append(jax.random.normal(kx, (N, H, W, C), jnp.float32))

    outs = group.forward(x_list)
    outs = [jax.block_until_ready(o) for o in outs]

    # Verify against the quantization-matched lax.conv reference.
    for k in range(len(task_info)):
        idx = group._feature_cat_indices(k)
        cx = jnp.concatenate([x_list[j] for j in idx] + [x_list[k]], axis=-1)
        ref = _ref_basic_block(cx, x_list[k], group.params[k],
                               remove_last_relu=group.remove_last_relu)
        np.testing.assert_allclose(np.asarray(outs[k]), np.asarray(ref),
                                   rtol=2e-2, atol=2e-2)

    print("KERNEL_OK")
</pallas_src>

<mosaic_0001>
module attributes {stable_mosaic.version = 11 : i64} {
  func.func @_basic_block_kernel(%arg0: i32, %arg1: memref<2x10x10x8xbf16, #tpu.memory_space<vmem>>, %arg2: memref<2x8x8x8xf32, #tpu.memory_space<vmem>>, %arg3: memref<72x8xbf16, #tpu.memory_space<vmem>>, %arg4: memref<72x8xbf16, #tpu.memory_space<vmem>>, %arg5: memref<4x8xf32, #tpu.memory_space<vmem>>, %arg6: memref<2x8x8x8xf32, #tpu.memory_space<vmem>>, %arg7: memref<2x10x10x8xf32, #tpu.memory_space<vmem>>) attributes {dimension_semantics = [#tpu.dimension_semantics<parallel>], iteration_bounds = array<i64: 1>, scalar_prefetch = 0 : i64, scratch_operands = 1 : i64, tpu.core_type = #tpu.core_type<tc>, window_params = [{transform_indices = @transform_0, window_bounds = array<i64: 2, 10, 10, 8>}, {transform_indices = @transform_1, window_bounds = array<i64: 2, 8, 8, 8>}, {pipeline_mode = #tpu.pipeline_mode<synchronous>, transform_indices = @transform_2, window_bounds = array<i64: 72, 8>}, {pipeline_mode = #tpu.pipeline_mode<synchronous>, transform_indices = @transform_3, window_bounds = array<i64: 72, 8>}, {pipeline_mode = #tpu.pipeline_mode<synchronous>, transform_indices = @transform_4, window_bounds = array<i64: 4, 8>}, {transform_indices = @transform_5, window_bounds = array<i64: 2, 8, 8, 8>}]} {
    %c0 = arith.constant 0 : index
    %c0_0 = arith.constant 0 : index
    %0 = vector.load %arg5[%c0, %c0_0] : memref<4x8xf32, #tpu.memory_space<vmem>>, vector<1x8xf32>
    %c1 = arith.constant 1 : index
    %c0_1 = arith.constant 0 : index
    %1 = vector.load %arg5[%c1, %c0_1] : memref<4x8xf32, #tpu.memory_space<vmem>>, vector<1x8xf32>
    %c2 = arith.constant 2 : index
    %c0_2 = arith.constant 0 : index
    %2 = vector.load %arg5[%c2, %c0_2] : memref<4x8xf32, #tpu.memory_space<vmem>>, vector<1x8xf32>
    %c3 = arith.constant 3 : index
    %c0_3 = arith.constant 0 : index
    %3 = vector.load %arg5[%c3, %c0_3] : memref<4x8xf32, #tpu.memory_space<vmem>>, vector<1x8xf32>
    %c0_4 = arith.constant 0 : index
    %c0_5 = arith.constant 0 : index
    %c0_6 = arith.constant 0 : index
    %c0_7 = arith.constant 0 : index
    %4 = vector.load %arg1[%c0_4, %c0_5, %c0_6, %c0_7] : memref<2x10x10x8xbf16, #tpu.memory_space<vmem>>, vector<2x10x10x8xbf16>
    %5 = arith.extf %4 : vector<2x10x10x8xbf16> to vector<2x10x10x8xf32>
    %6 = vector.extract_strided_slice %5 {offsets = [0, 0, 0, 0], sizes = [2, 8, 8, 8], strides = [1, 1, 1, 1]} : vector<2x10x10x8xf32> to vector<2x8x8x8xf32>
    %7 = vector.shape_cast %6 : vector<2x8x8x8xf32> to vector<128x8xf32>
    %8 = vector.extract_strided_slice %5 {offsets = [0, 0, 1, 0], sizes = [2, 8, 8, 8], strides = [1, 1, 1, 1]} : vector<2x10x10x8xf32> to vector<2x8x8x8xf32>
    %9 = vector.shape_cast %8 : vector<2x8x8x8xf32> to vector<128x8xf32>
    %10 = vector.extract_strided_slice %5 {offsets = [0, 0, 2, 0], sizes = [2, 8, 8, 8], strides = [1, 1, 1, 1]} : vector<2x10x10x8xf32> to vector<2x8x8x8xf32>
    %11 = vector.shape_cast %10 : vector<2x8x8x8xf32> to vector<128x8xf32>
    %12 = vector.extract_strided_slice %5 {offsets = [0, 1, 0, 0], sizes = [2, 8, 8, 8], strides = [1, 1, 1, 1]} : vector<2x10x10x8xf32> to vector<2x8x8x8xf32>
    %13 = vector.shape_cast %12 : vector<2x8x8x8xf32> to vector<128x8xf32>
    %14 = vector.extract_strided_slice %5 {offsets = [0, 1, 1, 0], sizes = [2, 8, 8, 8], strides = [1, 1, 1, 1]} : vector<2x10x10x8xf32> to vector<2x8x8x8xf32>
    %15 = vector.shape_cast %14 : vector<2x8x8x8xf32> to vector<128x8xf32>
    %16 = vector.extract_strided_slice %5 {offsets = [0, 1, 2, 0], sizes = [2, 8, 8, 8], strides = [1, 1, 1, 1]} : vector<2x10x10x8xf32> to vector<2x8x8x8xf32>
    %17 = vector.shape_cast %16 : vector<2x8x8x8xf32> to vector<128x8xf32>
    %18 = vector.extract_strided_slice %5 {offsets = [0, 2, 0, 0], sizes = [2, 8, 8, 8], strides = [1, 1, 1, 1]} : vector<2x10x10x8xf32> to vector<2x8x8x8xf32>
    %19 = vector.shape_cast %18 : vector<2x8x8x8xf32> to vector<128x8xf32>
    %20 = vector.extract_strided_slice %5 {offsets = [0, 2, 1, 0], sizes = [2, 8, 8, 8], strides = [1, 1, 1, 1]} : vector<2x10x10x8xf32> to vector<2x8x8x8xf32>
    %21 = vector.shape_cast %20 : vector<2x8x8x8xf32> to vector<128x8xf32>
    %22 = vector.extract_strided_slice %5 {offsets = [0, 2, 2, 0], sizes = [2, 8, 8, 8], strides = [1, 1, 1, 1]} : vector<2x10x10x8xf32> to vector<2x8x8x8xf32>
    %23 = vector.shape_cast %22 : vector<2x8x8x8xf32> to vector<128x8xf32>
    %24 = tpu.concatenate %7, %9, %11, %13, %15, %17, %19, %21, %23 in 1 : vector<128x8xf32>, vector<128x8xf32>, vector<128x8xf32>, vector<128x8xf32>, vector<128x8xf32>, vector<128x8xf32>, vector<128x8xf32>, vector<128x8xf32>, vector<128x8xf32> -> vector<128x72xf32>
    %25 = arith.truncf %24 : vector<128x72xf32> to vector<128x72xbf16>
    %c0_8 = arith.constant 0 : index
    %c0_9 = arith.constant 0 : index
    %26 = vector.load %arg3[%c0_8, %c0_9] : memref<72x8xbf16, #tpu.memory_space<vmem>>, vector<72x8xbf16>
    %cst = arith.constant dense<0.000000e+00> : vector<128x8xf32>
    %27 = tpu.matmul %25, %26, %cst {dimension_numbers = #tpu.dot_dimension_numbers<[1], [0], [0], [1], [0, 0, 1, 1], [], []>} : vector<128x72xbf16>, vector<72x8xbf16>, vector<128x8xf32> -> vector<128x8xf32>
    %28 = vector.broadcast %0 : vector<1x8xf32> to vector<128x8xf32>
    %29 = arith.mulf %27, %28 : vector<128x8xf32>
    %30 = vector.broadcast %1 : vector<1x8xf32> to vector<128x8xf32>
    %31 = arith.addf %29, %30 : vector<128x8xf32>
    %cst_10 = arith.constant 0.000000e+00 : f32
    %32 = vector.broadcast %cst_10 : f32 to vector<128x8xf32>
    %33 = arith.maximumf %31, %32 : vector<128x8xf32>
    %cst_11 = arith.constant 0.000000e+00 : f32
    %34 = vector.broadcast %cst_11 : f32 to vector<2x1x10x8xf32>
    %c0_12 = arith.constant 0 : index
    %c0_13 = arith.constant 0 : index
    %c0_14 = arith.constant 0 : index
    %c0_15 = arith.constant 0 : index
    %35 = vector.load %arg7[%c0_12, %c0_13, %c0_14, %c0_15] : memref<2x10x10x8xf32, #tpu.memory_space<vmem>>, vector<2x1x10x8xf32>
    tpu.vector_store %arg7[%c0_12, %c0_13, %c0_14, %c0_15], %34 {strides = array<i32>} : memref<2x10x10x8xf32, #tpu.memory_space<vmem>>, vector<2x1x10x8xf32>,
    %cst_16 = arith.constant 0.000000e+00 : f32
    %36 = vector.broadcast %cst_16 : f32 to vector<2x1x10x8xf32>
    %c0_17 = arith.constant 0 : index
    %c9 = arith.constant 9 : index
    %c0_18 = arith.constant 0 : index
    %c0_19 = arith.constant 0 : index
    %37 = vector.load %arg7[%c0_17, %c9, %c0_18, %c0_19] : memref<2x10x10x8xf32, #tpu.memory_space<vmem>>, vector<2x1x10x8xf32>
    tpu.vector_store %arg7[%c0_17, %c9, %c0_18, %c0_19], %36 {strides = array<i32>} : memref<2x10x10x8xf32, #tpu.memory_space<vmem>>, vector<2x1x10x8xf32>,
    %cst_20 = arith.constant 0.000000e+00 : f32
    %38 = vector.broadcast %cst_20 : f32 to vector<2x10x1x8xf32>
    %c0_21 = arith.constant 0 : index
    %c0_22 = arith.constant 0 : index
    %c0_23 = arith.constant 0 : index
    %c0_24 = arith.constant 0 : index
    %39 = vector.load %arg7[%c0_21, %c0_22, %c0_23, %c0_24] : memref<2x10x10x8xf32, #tpu.memory_space<vmem>>, vector<2x10x1x8xf32>
    tpu.vector_store %arg7[%c0_21, %c0_22, %c0_23, %c0_24], %38 {strides = array<i32>} : memref<2x10x10x8xf32, #tpu.memory_space<vmem>>, vector<2x10x1x8xf32>,
    %cst_25 = arith.constant 0.000000e+00 : f32
    %40 = vector.broadcast %cst_25 : f32 to vector<2x10x1x8xf32>
    %c0_26 = arith.constant 0 : index
    %c0_27 = arith.constant 0 : index
    %c9_28 = arith.constant 9 : index
    %c0_29 = arith.constant 0 : index
    %41 = vector.load %arg7[%c0_26, %c0_27, %c9_28, %c0_29] : memref<2x10x10x8xf32, #tpu.memory_space<vmem>>, vector<2x10x1x8xf32>
    tpu.vector_store %arg7[%c0_26, %c0_27, %c9_28, %c0_29], %40 {strides = array<i32>} : memref<2x10x10x8xf32, #tpu.memory_space<vmem>>, vector<2x10x1x8xf32>,
    %42 = vector.shape_cast %33 : vector<128x8xf32> to vector<2x8x8x8xf32>
    %c0_30 = arith.constant 0 : index
    %c1_31 = arith.constant 1 : index
    %c1_32 = arith.constant 1 : index
    %c0_33 = arith.constant 0 : index
    %43 = vector.load %arg7[%c0_30, %c1_31, %c1_32, %c0_33] : memref<2x10x10x8xf32, #tpu.memory_space<vmem>>, vector<2x8x8x8xf32>
    tpu.vector_store %arg7[%c0_30, %c1_31, %c1_32, %c0_33], %42 {strides = array<i32>} : memref<2x10x10x8xf32, #tpu.memory_space<vmem>>, vector<2x8x8x8xf32>,
    %c0_34 = arith.constant 0 : index
    %c0_35 = arith.constant 0 : index
    %c0_36 = arith.constant 0 : index
    %c0_37 = arith.constant 0 : index
    %44 = vector.load %arg7[%c0_34, %c0_35, %c0_36, %c0_37] : memref<2x10x10x8xf32, #tpu.memory_space<vmem>>, vector<2x10x10x8xf32>
    %45 = vector.extract_strided_slice %44 {offsets = [0, 0, 0, 0], sizes = [2, 8, 8, 8], strides = [1, 1, 1, 1]} : vector<2x10x10x8xf32> to vector<2x8x8x8xf32>
    %46 = vector.shape_cast %45 : vector<2x8x8x8xf32> to vector<128x8xf32>
    %47 = vector.extract_strided_slice %44 {offsets = [0, 0, 1, 0], sizes = [2, 8, 8, 8], strides = [1, 1, 1, 1]} : vector<2x10x10x8xf32> to vector<2x8x8x8xf32>
    %48 = vector.shape_cast %47 : vector<2x8x8x8xf32> to vector<128x8xf32>
    %49 = vector.extract_strided_slice %44 {offsets = [0, 0, 2, 0], sizes = [2, 8, 8, 8], strides = [1, 1, 1, 1]} : vector<2x10x10x8xf32> to vector<2x8x8x8xf32>
    %50 = vector.shape_cast %49 : vector<2x8x8x8xf32> to vector<128x8xf32>
    %51 = vector.extract_strided_slice %44 {offsets = [0, 1, 0, 0], sizes = [2, 8, 8, 8], strides = [1, 1, 1, 1]} : vector<2x10x10x8xf32> to vector<2x8x8x8xf32>
    %52 = vector.shape_cast %51 : vector<2x8x8x8xf32> to vector<128x8xf32>
    %53 = vector.extract_strided_slice %44 {offsets = [0, 1, 1, 0], sizes = [2, 8, 8, 8], strides = [1, 1, 1, 1]} : vector<2x10x10x8xf32> to vector<2x8x8x8xf32>
    %54 = vector.shape_cast %53 : vector<2x8x8x8xf32> to vector<128x8xf32>
    %55 = vector.extract_strided_slice %44 {offsets = [0, 1, 2, 0], sizes = [2, 8, 8, 8], strides = [1, 1, 1, 1]} : vector<2x10x10x8xf32> to vector<2x8x8x8xf32>
    %56 = vector.shape_cast %55 : vector<2x8x8x8xf32> to vector<128x8xf32>
    %57 = vector.extract_strided_slice %44 {offsets = [0, 2, 0, 0], sizes = [2, 8, 8, 8], strides = [1, 1, 1, 1]} : vector<2x10x10x8xf32> to vector<2x8x8x8xf32>
    %58 = vector.shape_cast %57 : vector<2x8x8x8xf32> to vector<128x8xf32>
    %59 = vector.extract_strided_slice %44 {offsets = [0, 2, 1, 0], sizes = [2, 8, 8, 8], strides = [1, 1, 1, 1]} : vector<2x10x10x8xf32> to vector<2x8x8x8xf32>
    %60 = vector.shape_cast %59 : vector<2x8x8x8xf32> to vector<128x8xf32>
    %61 = vector.extract_strided_slice %44 {offsets = [0, 2, 2, 0], sizes = [2, 8, 8, 8], strides = [1, 1, 1, 1]} : vector<2x10x10x8xf32> to vector<2x8x8x8xf32>
    %62 = vector.shape_cast %61 : vector<2x8x8x8xf32> to vector<128x8xf32>
    %63 = tpu.concatenate %46, %48, %50, %52, %54, %56, %58, %60, %62 in 1 : vector<128x8xf32>, vector<128x8xf32>, vector<128x8xf32>, vector<128x8xf32>, vector<128x8xf32>, vector<128x8xf32>, vector<128x8xf32>, vector<128x8xf32>, vector<128x8xf32> -> vector<128x72xf32>
    %64 = arith.truncf %63 : vector<128x72xf32> to vector<128x72xbf16>
    %c0_38 = arith.constant 0 : index
    %c0_39 = arith.constant 0 : index
    %65 = vector.load %arg4[%c0_38, %c0_39] : memref<72x8xbf16, #tpu.memory_space<vmem>>, vector<72x8xbf16>
    %cst_40 = arith.constant dense<0.000000e+00> : vector<128x8xf32>
    %66 = tpu.matmul %64, %65, %cst_40 {dimension_numbers = #tpu.dot_dimension_numbers<[1], [0], [0], [1], [0, 0, 1, 1], [], []>} : vector<128x72xbf16>, vector<72x8xbf16>, vector<128x8xf32> -> vector<128x8xf32>
    %67 = vector.broadcast %2 : vector<1x8xf32> to vector<128x8xf32>
    %68 = arith.mulf %66, %67 : vector<128x8xf32>
    %69 = vector.broadcast %3 : vector<1x8xf32> to vector<128x8xf32>
    %70 = arith.addf %68, %69 : vector<128x8xf32>
    %c0_41 = arith.constant 0 : index
    %c0_42 = arith.constant 0 : index
    %c0_43 = arith.constant 0 : index
    %c0_44 = arith.constant 0 : index
    %71 = vector.load %arg2[%c0_41, %c0_42, %c0_43, %c0_44] : memref<2x8x8x8xf32, #tpu.memory_space<vmem>>, vector<2x8x8x8xf32>
    %72 = vector.shape_cast %71 : vector<2x8x8x8xf32> to vector<128x8xf32>
    %73 = arith.addf %70, %72 : vector<128x8xf32>
    %cst_45 = arith.constant 0.000000e+00 : f32
    %74 = vector.broadcast %cst_45 : f32 to vector<128x8xf32>
    %75 = arith.maximumf %73, %74 : vector<128x8xf32>
    %76 = vector.shape_cast %75 : vector<128x8xf32> to vector<2x8x8x8xf32>
    %c0_46 = arith.constant 0 : index
    %c0_47 = arith.constant 0 : index
    %c0_48 = arith.constant 0 : index
    %c0_49 = arith.constant 0 : index
    %77 = vector.load %arg6[%c0_46, %c0_47, %c0_48, %c0_49] : memref<2x8x8x8xf32, #tpu.memory_space<vmem>>, vector<2x8x8x8xf32>
    tpu.vector_store %arg6[%c0_46, %c0_47, %c0_48, %c0_49], %76 {strides = array<i32>} : memref<2x8x8x8xf32, #tpu.memory_space<vmem>>, vector<2x8x8x8xf32>,
    return
  }
  func.func @transform_0(%arg0: i32) -> (i32, i32, i32, i32) {
    %c0_i32 = arith.constant 0 : i32
    %c0_i32_0 = arith.constant 0 : i32
    %c0_i32_1 = arith.constant 0 : i32
    %c0_i32_2 = arith.constant 0 : i32
    return %arg0, %c0_i32, %c0_i32_0, %c0_i32_1 : i32, i32, i32, i32
  }
  func.func @transform_1(%arg0: i32) -> (i32, i32, i32, i32) {
    %c0_i32 = arith.constant 0 : i32
    %c0_i32_0 = arith.constant 0 : i32
    %c0_i32_1 = arith.constant 0 : i32
    %c0_i32_2 = arith.constant 0 : i32
    return %arg0, %c0_i32, %c0_i32_0, %c0_i32_1 : i32, i32, i32, i32
  }
  func.func @transform_2(%arg0: i32) -> (i32, i32) {
    %c0_i32 = arith.constant 0 : i32
    %c0_i32_0 = arith.constant 0 : i32
    %c0_i32_1 = arith.constant 0 : i32
    return %c0_i32, %c0_i32_0 : i32, i32
  }
  func.func @transform_3(%arg0: i32) -> (i32, i32) {
    %c0_i32 = arith.constant 0 : i32
    %c0_i32_0 = arith.constant 0 : i32
    %c0_i32_1 = arith.constant 0 : i32
    return %c0_i32, %c0_i32_0 : i32, i32
  }
  func.func @transform_4(%arg0: i32) -> (i32, i32) {
    %c0_i32 = arith.constant 0 : i32
    %c0_i32_0 = arith.constant 0 : i32
    %c0_i32_1 = arith.constant 0 : i32
    return %c0_i32, %c0_i32_0 : i32, i32
  }
  func.func @transform_5(%arg0: i32) -> (i32, i32, i32, i32) {
    %c0_i32 = arith.constant 0 : i32
    %c0_i32_0 = arith.constant 0 : i32
    %c0_i32_1 = arith.constant 0 : i32
    %c0_i32_2 = arith.constant 0 : i32
    return %arg0, %c0_i32, %c0_i32_0, %c0_i32_1 : i32, i32, i32, i32
  }
}

</mosaic_0001>

<llo_original>
// kernel: tpu_custom_call.1
$region0: #{tpu_custom_call.1}
  #allocation0 [shape = 'u32[]', space=smem, size = 0x4, offset = 0x4, fixed_abs, tag = 'smem constant byte address 0x4 - core index']
  #allocation1 [shape = 'u32[144,128]{1,0:T(1,128)}', space=vmem, size = 0x12000, scoped, tag = 'internal scratch']
  #allocation2 [shape = 'f32[2,10,10,8]{3,2,1,0:T(8,128)}', space=vmem, size = 0x28000, scoped, tag = 'scratch operand']
  %s0 = inlined_call_operand.vmem [shape: bf16[2,10,10,8], index: 0, kind: input, shape index: {}]
  %s1 = inlined_call_operand.vmem [shape: f32[2,8,8,8], index: 1, kind: input, shape index: {}]
  %s2 = inlined_call_operand.vmem [shape: bf16[72,8], index: 2, kind: input, shape index: {}]
  %s3 = inlined_call_operand.vmem [shape: bf16[72,8], index: 3, kind: input, shape index: {}]
  %s4 = inlined_call_operand.vmem [shape: f32[4,8], index: 4, kind: input, shape index: {}]
  %s5 = inlined_call_operand.hbm [shape: f32[2,8,8,8], index: 5, kind: output, shape index: {}]
  %s6 = sld [smem:[#allocation0]]
  $region30: #{tpu_custom_call.1} parent=0
    _
  %s8 = ssub.s32 1, %s6
  %s9 = scalar_select 0, %s8, %s6
  $region1: #{tpu_custom_call.1} parent=0
    #allocation3 [shape = 'u8[65536]{0}', space=vmem, size = 0x10000, scoped, tag = 'output window, operand 0, single buffered']
    #allocation4 [shape = 's32[1]{0}', space=sflag, size = 0x4, scoped, tag = 'scoped memory for tpu_custom_call.1']
    %10 = vsyncpa [#allocation4], 0
    // Predicated region
    $region2: #{tpu_custom_call.1} parent=1 // pred_check
      _
    $region3: #{tpu_custom_call.1} parent=1 // pred_check_branch
      %12 = sbr.rel (0) target = $region5
    $region4: #{tpu_custom_call.1} parent=1 // pred_region
      _
    $region5: #{tpu_custom_call.1} parent=1 // pred_fallthru
      _
    // Predicated region
    $region6: #{tpu_custom_call.1} parent=1 // pred_check
      _
    $region7: #{tpu_custom_call.1} parent=1 // pred_check_branch
      %14 = sbr.rel (0) target = $region9
    $region8: #{tpu_custom_call.1} parent=1 // pred_region
      _
    $region9: #{tpu_custom_call.1} parent=1 // pred_fallthru
      _
    // Predicated region
    $region10: #{tpu_custom_call.1} parent=1 // pred_check
      _
    $region11: #{tpu_custom_call.1} parent=1 // pred_check_branch
      %16 = sbr.rel (0) target = $region13
    $region12: #{tpu_custom_call.1} parent=1 // pred_region
      _
    $region13: #{tpu_custom_call.1} parent=1 // pred_fallthru
      _
    // Predicated region
    $region14: #{tpu_custom_call.1} parent=1 // pred_check
      _
    $region15: #{tpu_custom_call.1} parent=1 // pred_check_branch
      %18 = sbr.rel (0) target = $region17
    $region16: #{tpu_custom_call.1} parent=1 // pred_region
      _
    $region17: #{tpu_custom_call.1} parent=1 // pred_fallthru
      _
    // Predicated region
    $region18: #{tpu_custom_call.1} parent=1 // pred_check
      _
    $region19: #{tpu_custom_call.1} parent=1 // pred_check_branch
      %20 = sbr.rel (0) target = $region21
    $region20: #{tpu_custom_call.1} parent=1 // pred_region
      _
    $region21: #{tpu_custom_call.1} parent=1 // pred_fallthru
      _
    %v22 = vld [vmem:[%s4] sm:$0x1]
    %v23 = vld [vmem:[%s4 + $0x1] sm:$0x1]
    %v24 = vld [vmem:[%s4 + $0x2] sm:$0x1]
    %v25 = vld [vmem:[%s4 + $0x3] sm:$0x1]
    %v26 = vld [vmem:[%s0] sm:$0xf]
    %v27 = vld [vmem:[%s0 + $0x4] sm:$0x1]
    %v28 = vld [vmem:[%s0 + $0x8] sm:$0xf]
    %v29 = vld [vmem:[%s0 + $0xc] sm:$0x1]
    %v30 = vld [vmem:[%s0 + $0x10] sm:$0xf]
    %v31 = vld [vmem:[%s0 + $0x14] sm:$0x1]
    %v32 = vld [vmem:[%s0 + $0x18] sm:$0xf]
    %v33 = vld [vmem:[%s0 + $0x1c] sm:$0x1]
    %v34 = vld [vmem:[%s0 + $0x20] sm:$0xf]
    %v35 = vld [vmem:[%s0 + $0x24] sm:$0x1]
    %v36 = vld [vmem:[%s0 + $0x28] sm:$0xf]
    %v37 = vld [vmem:[%s0 + $0x2c] sm:$0x1]
    %v38 = vld [vmem:[%s0 + $0x30] sm:$0xf]
    %v39 = vld [vmem:[%s0 + $0x34] sm:$0x1]
    %v40 = vld [vmem:[%s0 + $0x38] sm:$0xf]
    %v41 = vld [vmem:[%s0 + $0x3c] sm:$0x1]
    %v42 = vld [vmem:[%s0 + $0x40] sm:$0xf]
    %v43 = vld [vmem:[%s0 + $0x44] sm:$0x1]
    %v44 = vld [vmem:[%s0 + $0x48] sm:$0xf]
    %v45 = vld [vmem:[%s0 + $0x4c] sm:$0x1]
    %v46 = vld [vmem:[%s0 + $0x50] sm:$0xf]
    %v47 = vld [vmem:[%s0 + $0x54] sm:$0x1]
    %v48 = vld [vmem:[%s0 + $0x58] sm:$0xf]
    %v49 = vld [vmem:[%s0 + $0x5c] sm:$0x1]
    %v50 = vld [vmem:[%s0 + $0x60] sm:$0xf]
    %v51 = vld [vmem:[%s0 + $0x64] sm:$0x1]
    %v52 = vld [vmem:[%s0 + $0x68] sm:$0xf]
    %v53 = vld [vmem:[%s0 + $0x6c] sm:$0x1]
    %v54 = vld [vmem:[%s0 + $0x70] sm:$0xf]
    %v55 = vld [vmem:[%s0 + $0x74] sm:$0x1]
    %v56 = vld [vmem:[%s0 + $0x78] sm:$0xf]
    %v57 = vld [vmem:[%s0 + $0x7c] sm:$0x1]
    %v58 = vld [vmem:[%s0 + $0x80] sm:$0xf]
    %v59 = vld [vmem:[%s0 + $0x84] sm:$0x1]
    %v60 = vld [vmem:[%s0 + $0x88] sm:$0xf]
    %v61 = vld [vmem:[%s0 + $0x8c] sm:$0x1]
    %v62 = vld [vmem:[%s0 + $0x90] sm:$0xf]
    %v63 = vld [vmem:[%s0 + $0x94] sm:$0x1]
    %v64 = vld [vmem:[%s0 + $0x98] sm:$0xf]
    %v65 = vld [vmem:[%s0 + $0x9c] sm:$0x1]
    %v66 = vunpack.c.l.bf16 %v26
    %v67 = vunpack.c.l.bf16 %v27
    %v68 = vunpack.c.l.bf16 %v28
    %v69 = vunpack.c.l.bf16 %v29
    %v70 = vunpack.c.l.bf16 %v30
    %v71 = vunpack.c.l.bf16 %v31
    %v72 = vunpack.c.l.bf16 %v32
    %v73 = vunpack.c.l.bf16 %v33
    %v74 = vunpack.c.l.bf16 %v34
    %v75 = vunpack.c.l.bf16 %v35
    %v76 = vunpack.c.l.bf16 %v36
    %v77 = vunpack.c.l.bf16 %v37
    %v78 = vunpack.c.l.bf16 %v38
    %v79 = vunpack.c.l.bf16 %v39
    %v80 = vunpack.c.l.bf16 %v40
    %v81 = vunpack.c.l.bf16 %v41
    %v82 = vunpack.c.l.bf16 %v42
    %v83 = vunpack.c.l.bf16 %v43
    %v84 = vunpack.c.l.bf16 %v44
    %v85 = vunpack.c.l.bf16 %v45
    %v86 = vunpack.c.l.bf16 %v46
    %v87 = vunpack.c.l.bf16 %v47
    %v88 = vunpack.c.l.bf16 %v48
    %v89 = vunpack.c.l.bf16 %v49
    %v90 = vunpack.c.l.bf16 %v50
    %v91 = vunpack.c.l.bf16 %v51
    %v92 = vunpack.c.l.bf16 %v52
    %v93 = vunpack.c.l.bf16 %v53
    %v94 = vunpack.c.l.bf16 %v54
    %v95 = vunpack.c.l.bf16 %v55
    %v96 = vunpack.c.l.bf16 %v56
    %v97 = vunpack.c.l.bf16 %v57
    %v98 = vunpack.c.l.bf16 %v58
    %v99 = vunpack.c.l.bf16 %v59
    %v100 = vunpack.c.l.bf16 %v60
    %v101 = vunpack.c.l.bf16 %v61
    %v102 = vunpack.c.l.bf16 %v62
    %v103 = vunpack.c.l.bf16 %v63
    %v104 = vunpack.c.l.bf16 %v64
    %v105 = vunpack.c.l.bf16 %v65
    %vm138 = vcmask 1046528
    %v139 = vrot.slane %v66, 1
    %v140 = vrot.slane %v67, 1
    %v141 = vsel %vm138, %v139, %v140
    %v142 = vrot.slane %v68, 1
    %v143 = vrot.slane %v69, 1
    %v144 = vsel %vm138, %v142, %v143
    %v145 = vrot.slane %v70, 1
    %v146 = vrot.slane %v71, 1
    %v147 = vsel %vm138, %v145, %v146
    %v148 = vrot.slane %v72, 1
    %v149 = vrot.slane %v73, 1
    %v150 = vsel %vm138, %v148, %v149
    %v151 = vrot.slane %v74, 1
    %v152 = vrot.slane %v75, 1
    %v153 = vsel %vm138, %v151, %v152
    %v154 = vrot.slane %v76, 1
    %v155 = vrot.slane %v77, 1
    %v156 = vsel %vm138, %v154, %v155
    %v157 = vrot.slane %v78, 1
    %v158 = vrot.slane %v79, 1
    %v159 = vsel %vm138, %v157, %v158
    %v160 = vrot.slane %v80, 1
    %v161 = vrot.slane %v81, 1
    %v162 = vsel %vm138, %v160, %v161
    %v163 = vrot.slane %v86, 1
    %v164 = vrot.slane %v87, 1
    %v165 = vsel %vm138, %v163, %v164
    %v166 = vrot.slane %v88, 1
    %v167 = vrot.slane %v89, 1
    %v168 = vsel %vm138, %v166, %v167
    %v169 = vrot.slane %v90, 1
    %v170 = vrot.slane %v91, 1
    %v171 = vsel %vm138, %v169, %v170
    %v172 = vrot.slane %v92, 1
    %v173 = vrot.slane %v93, 1
    %v174 = vsel %vm138, %v172, %v173
    %v175 = vrot.slane %v94, 1
    %v176 = vrot.slane %v95, 1
    %v177 = vsel %vm138, %v175, %v176
    %v178 = vrot.slane %v96, 1
    %v179 = vrot.slane %v97, 1
    %v180 = vsel %vm138, %v178, %v179
    %v181 = vrot.slane %v98, 1
    %v182 = vrot.slane %v99, 1
    %v183 = vsel %vm138, %v181, %v182
    %v184 = vrot.slane %v100, 1
    %v185 = vrot.slane %v101, 1
    %v186 = vsel %vm138, %v184, %v185
    %vm187 = vcmask 1045504
    %v188 = vrot.slane %v66, 2
    %v189 = vrot.slane %v67, 2
    %v190 = vsel %vm187, %v188, %v189
    %v191 = vrot.slane %v68, 2
    %v192 = vrot.slane %v69, 2
    %v193 = vsel %vm187, %v191, %v192
    %v194 = vrot.slane %v70, 2
    %v195 = vrot.slane %v71, 2
    %v196 = vsel %vm187, %v194, %v195
    %v197 = vrot.slane %v72, 2
    %v198 = vrot.slane %v73, 2
    %v199 = vsel %vm187, %v197, %v198
    %v200 = vrot.slane %v74, 2
    %v201 = vrot.slane %v75, 2
    %v202 = vsel %vm187, %v200, %v201
    %v203 = vrot.slane %v76, 2
    %v204 = vrot.slane %v77, 2
    %v205 = vsel %vm187, %v203, %v204
    %v206 = vrot.slane %v78, 2
    %v207 = vrot.slane %v79, 2
    %v208 = vsel %vm187, %v206, %v207
    %v209 = vrot.slane %v80, 2
    %v210 = vrot.slane %v81, 2
    %v211 = vsel %vm187, %v209, %v210
    %v212 = vrot.slane %v86, 2
    %v213 = vrot.slane %v87, 2
    %v214 = vsel %vm187, %v212, %v213
    %v215 = vrot.slane %v88, 2
    %v216 = vrot.slane %v89, 2
    %v217 = vsel %vm187, %v215, %v216
    %v218 = vrot.slane %v90, 2
    %v219 = vrot.slane %v91, 2
    %v220 = vsel %vm187, %v218, %v219
    %v221 = vrot.slane %v92, 2
    %v222 = vrot.slane %v93, 2
    %v223 = vsel %vm187, %v221, %v222
    %v224 = vrot.slane %v94, 2
    %v225 = vrot.slane %v95, 2
    %v226 = vsel %vm187, %v224, %v225
    %v227 = vrot.slane %v96, 2
    %v228 = vrot.slane %v97, 2
    %v229 = vsel %vm187, %v227, %v228
    %v230 = vrot.slane %v98, 2
    %v231 = vrot.slane %v99, 2
    %v232 = vsel %vm187, %v230, %v231
    %v233 = vrot.slane %v100, 2
    %v234 = vrot.slane %v101, 2
    %v235 = vsel %vm187, %v233, %v234
    %v240 = vrot.slane %v82, 1
    %v241 = vrot.slane %v83, 1
    %v242 = vsel %vm138, %v240, %v241
    %v243 = vrot.slane %v102, 1
    %v244 = vrot.slane %v103, 1
    %v245 = vsel %vm138, %v243, %v244
    %v246 = vrot.slane %v82, 2
    %v247 = vrot.slane %v83, 2
    %v248 = vsel %vm187, %v246, %v247
    %v249 = vrot.slane %v102, 2
    %v250 = vrot.slane %v103, 2
    %v251 = vsel %vm187, %v249, %v250
    %v256 = vrot.slane %v84, 1
    %v257 = vrot.slane %v85, 1
    %v258 = vsel %vm138, %v256, %v257
    %v259 = vrot.slane %v104, 1
    %v260 = vrot.slane %v105, 1
    %v261 = vsel %vm138, %v259, %v260
    %v262 = vrot.slane %v84, 2
    %v263 = vrot.slane %v85, 2
    %v264 = vsel %vm187, %v262, %v263
    %v265 = vrot.slane %v104, 2
    %v266 = vrot.slane %v105, 2
    %v267 = vsel %vm187, %v265, %v266
    %268 = vrot.lane.b32.xlu0 %v141, 8
    %v269 = vpop.permute.xlu0 %268
    %270 = vrot.lane.b32.xlu0 %v144, 8
    %v271 = vpop.permute.xlu0 %270
    %272 = vrot.lane.b32.xlu0 %v147, 8
    %v273 = vpop.permute.xlu0 %272
    %274 = vrot.lane.b32.xlu0 %v150, 8
    %v275 = vpop.permute.xlu0 %274
    %276 = vrot.lane.b32.xlu0 %v153, 8
    %v277 = vpop.permute.xlu0 %276
    %278 = vrot.lane.b32.xlu0 %v156, 8
    %v279 = vpop.permute.xlu0 %278
    %280 = vrot.lane.b32.xlu0 %v159, 8
    %v281 = vpop.permute.xlu0 %280
    %282 = vrot.lane.b32.xlu0 %v162, 8
    %v283 = vpop.permute.xlu0 %282
    %284 = vrot.lane.b32.xlu0 %v165, 8
    %v285 = vpop.permute.xlu0 %284
    %286 = vrot.lane.b32.xlu0 %v168, 8
    %v287 = vpop.permute.xlu0 %286
    %288 = vrot.lane.b32.xlu0 %v171, 8
    %v289 = vpop.permute.xlu0 %288
    %290 = vrot.lane.b32.xlu0 %v174, 8
    %v291 = vpop.permute.xlu0 %290
    %292 = vrot.lane.b32.xlu0 %v177, 8
    %v293 = vpop.permute.xlu0 %292
    %294 = vrot.lane.b32.xlu0 %v180, 8
    %v295 = vpop.permute.xlu0 %294
    %296 = vrot.lane.b32.xlu0 %v183, 8
    %v297 = vpop.permute.xlu0 %296
    %298 = vrot.lane.b32.xlu0 %v186, 8
    %v299 = vpop.permute.xlu0 %298
    %316 = vrot.lane.b32.xlu0 %v190, 16
    %v317 = vpop.permute.xlu0 %316
    %318 = vrot.lane.b32.xlu0 %v193, 16
    %v319 = vpop.permute.xlu0 %318
    %320 = vrot.lane.b32.xlu0 %v196, 16
    %v321 = vpop.permute.xlu0 %320
    %322 = vrot.lane.b32.xlu0 %v199, 16
    %v323 = vpop.permute.xlu0 %322
    %324 = vrot.lane.b32.xlu0 %v202, 16
    %v325 = vpop.permute.xlu0 %324
    %326 = vrot.lane.b32.xlu0 %v205, 16
    %v327 = vpop.permute.xlu0 %326
    %328 = vrot.lane.b32.xlu0 %v208, 16
    %v329 = vpop.permute.xlu0 %328
    %330 = vrot.lane.b32.xlu0 %v211, 16
    %v331 = vpop.permute.xlu0 %330
    %332 = vrot.lane.b32.xlu0 %v214, 16
    %v333 = vpop.permute.xlu0 %332
    %334 = vrot.lane.b32.xlu0 %v217, 16
    %v335 = vpop.permute.xlu0 %334
    %336 = vrot.lane.b32.xlu0 %v220, 16
    %v337 = vpop.permute.xlu0 %336
    %338 = vrot.lane.b32.xlu0 %v223, 16
    %v339 = vpop.permute.xlu0 %338
    %340 = vrot.lane.b32.xlu0 %v226, 16
    %v341 = vpop.permute.xlu0 %340
    %342 = vrot.lane.b32.xlu0 %v229, 16
    %v343 = vpop.permute.xlu0 %342
    %344 = vrot.lane.b32.xlu0 %v232, 16
    %v345 = vpop.permute.xlu0 %344
    %346 = vrot.lane.b32.xlu0 %v235, 16
    %v347 = vpop.permute.xlu0 %346
    %364 = vrot.lane.b32.xlu0 %v68, 24
    %v365 = vpop.permute.xlu0 %364
    %366 = vrot.lane.b32.xlu0 %v70, 24
    %v367 = vpop.permute.xlu0 %366
    %368 = vrot.lane.b32.xlu0 %v72, 24
    %v369 = vpop.permute.xlu0 %368
    %370 = vrot.lane.b32.xlu0 %v74, 24
    %v371 = vpop.permute.xlu0 %370
    %372 = vrot.lane.b32.xlu0 %v76, 24
    %v373 = vpop.permute.xlu0 %372
    %374 = vrot.lane.b32.xlu0 %v78, 24
    %v375 = vpop.permute.xlu0 %374
    %376 = vrot.lane.b32.xlu0 %v80, 24
    %v377 = vpop.permute.xlu0 %376
    %378 = vrot.lane.b32.xlu0 %v82, 24
    %v379 = vpop.permute.xlu0 %378
    %380 = vrot.lane.b32.xlu0 %v88, 24
    %v381 = vpop.permute.xlu0 %380
    %382 = vrot.lane.b32.xlu0 %v90, 24
    %v383 = vpop.permute.xlu0 %382
    %384 = vrot.lane.b32.xlu0 %v92, 24
    %v385 = vpop.permute.xlu0 %384
    %386 = vrot.lane.b32.xlu0 %v94, 24
    %v387 = vpop.permute.xlu0 %386
    %388 = vrot.lane.b32.xlu0 %v96, 24
    %v389 = vpop.permute.xlu0 %388
    %390 = vrot.lane.b32.xlu0 %v98, 24
    %v391 = vpop.permute.xlu0 %390
    %392 = vrot.lane.b32.xlu0 %v100, 24
    %v393 = vpop.permute.xlu0 %392
    %394 = vrot.lane.b32.xlu0 %v102, 24
    %v395 = vpop.permute.xlu0 %394
    %412 = vrot.lane.b32.xlu0 %v144, 32
    %v413 = vpop.permute.xlu0 %412
    %414 = vrot.lane.b32.xlu0 %v147, 32
    %v415 = vpop.permute.xlu0 %414
    %416 = vrot.lane.b32.xlu0 %v150, 32
    %v417 = vpop.permute.xlu0 %416
    %418 = vrot.lane.b32.xlu0 %v153, 32
    %v419 = vpop.permute.xlu0 %418
    %420 = vrot.lane.b32.xlu0 %v156, 32
    %v421 = vpop.permute.xlu0 %420
    %422 = vrot.lane.b32.xlu0 %v159, 32
    %v423 = vpop.permute.xlu0 %422
    %424 = vrot.lane.b32.xlu0 %v162, 32
    %v425 = vpop.permute.xlu0 %424
    %426 = vrot.lane.b32.xlu0 %v242, 32
    %v427 = vpop.permute.xlu0 %426
    %428 = vrot.lane.b32.xlu0 %v168, 32
    %v429 = vpop.permute.xlu0 %428
    %430 = vrot.lane.b32.xlu0 %v171, 32
    %v431 = vpop.permute.xlu0 %430
    %432 = vrot.lane.b32.xlu0 %v174, 32
    %v433 = vpop.permute.xlu0 %432
    %434 = vrot.lane.b32.xlu0 %v177, 32
    %v435 = vpop.permute.xlu0 %434
    %436 = vrot.lane.b32.xlu0 %v180, 32
    %v437 = vpop.permute.xlu0 %436
    %438 = vrot.lane.b32.xlu0 %v183, 32
    %v439 = vpop.permute.xlu0 %438
    %440 = vrot.lane.b32.xlu0 %v186, 32
    %v441 = vpop.permute.xlu0 %440
    %442 = vrot.lane.b32.xlu0 %v245, 32
    %v443 = vpop.permute.xlu0 %442
    %460 = vrot.lane.b32.xlu0 %v193, 40
    %v461 = vpop.permute.xlu0 %460
    %462 = vrot.lane.b32.xlu0 %v196, 40
    %v463 = vpop.permute.xlu0 %462
    %464 = vrot.lane.b32.xlu0 %v199, 40
    %v465 = vpop.permute.xlu0 %464
    %466 = vrot.lane.b32.xlu0 %v202, 40
    %v467 = vpop.permute.xlu0 %466
    %468 = vrot.lane.b32.xlu0 %v205, 40
    %v469 = vpop.permute.xlu0 %468
    %470 = vrot.lane.b32.xlu0 %v208, 40
    %v471 = vpop.permute.xlu0 %470
    %472 = vrot.lane.b32.xlu0 %v211, 40
    %v473 = vpop.permute.xlu0 %472
    %474 = vrot.lane.b32.xlu0 %v248, 40
    %v475 = vpop.permute.xlu0 %474
    %476 = vrot.lane.b32.xlu0 %v217, 40
    %v477 = vpop.permute.xlu0 %476
    %478 = vrot.lane.b32.xlu0 %v220, 40
    %v479 = vpop.permute.xlu0 %478
    %480 = vrot.lane.b32.xlu0 %v223, 40
    %v481 = vpop.permute.xlu0 %480
    %482 = vrot.lane.b32.xlu0 %v226, 40
    %v483 = vpop.permute.xlu0 %482
    %484 = vrot.lane.b32.xlu0 %v229, 40
    %v485 = vpop.permute.xlu0 %484
    %486 = vrot.lane.b32.xlu0 %v232, 40
    %v487 = vpop.permute.xlu0 %486
    %488 = vrot.lane.b32.xlu0 %v235, 40
    %v489 = vpop.permute.xlu0 %488
    %490 = vrot.lane.b32.xlu0 %v251, 40
    %v491 = vpop.permute.xlu0 %490
    %508 = vrot.lane.b32.xlu0 %v70, 48
    %v509 = vpop.permute.xlu0 %508
    %510 = vrot.lane.b32.xlu0 %v72, 48
    %v511 = vpop.permute.xlu0 %510
    %512 = vrot.lane.b32.xlu0 %v74, 48
    %v513 = vpop.permute.xlu0 %512
    %514 = vrot.lane.b32.xlu0 %v76, 48
    %v515 = vpop.permute.xlu0 %514
    %516 = vrot.lane.b32.xlu0 %v78, 48
    %v517 = vpop.permute.xlu0 %516
    %518 = vrot.lane.b32.xlu0 %v80, 48
    %v519 = vpop.permute.xlu0 %518
    %520 = vrot.lane.b32.xlu0 %v82, 48
    %v521 = vpop.permute.xlu0 %520
    %522 = vrot.lane.b32.xlu0 %v84, 48
    %v523 = vpop.permute.xlu0 %522
    %524 = vrot.lane.b32.xlu0 %v90, 48
    %v525 = vpop.permute.xlu0 %524
    %526 = vrot.lane.b32.xlu0 %v92, 48
    %v527 = vpop.permute.xlu0 %526
    %528 = vrot.lane.b32.xlu0 %v94, 48
    %v529 = vpop.permute.xlu0 %528
    %530 = vrot.lane.b32.xlu0 %v96, 48
    %v531 = vpop.permute.xlu0 %530
    %532 = vrot.lane.b32.xlu0 %v98, 48
    %v533 = vpop.permute.xlu0 %532
    %534 = vrot.lane.b32.xlu0 %v100, 48
    %v535 = vpop.permute.xlu0 %534
    %536 = vrot.lane.b32.xlu0 %v102, 48
    %v537 = vpop.permute.xlu0 %536
    %538 = vrot.lane.b32.xlu0 %v104, 48
    %v539 = vpop.permute.xlu0 %538
    %556 = vrot.lane.b32.xlu0 %v147, 56
    %v557 = vpop.permute.xlu0 %556
    %558 = vrot.lane.b32.xlu0 %v150, 56
    %v559 = vpop.permute.xlu0 %558
    %560 = vrot.lane.b32.xlu0 %v153, 56
    %v561 = vpop.permute.xlu0 %560
    %562 = vrot.lane.b32.xlu0 %v156, 56
    %v563 = vpop.permute.xlu0 %562
    %564 = vrot.lane.b32.xlu0 %v159, 56
    %v565 = vpop.permute.xlu0 %564
    %566 = vrot.lane.b32.xlu0 %v162, 56
    %v567 = vpop.permute.xlu0 %566
    %568 = vrot.lane.b32.xlu0 %v242, 56
    %v569 = vpop.permute.xlu0 %568
    %570 = vrot.lane.b32.xlu0 %v258, 56
    %v571 = vpop.permute.xlu0 %570
    %572 = vrot.lane.b32.xlu0 %v171, 56
    %v573 = vpop.permute.xlu0 %572
    %574 = vrot.lane.b32.xlu0 %v174, 56
    %v575 = vpop.permute.xlu0 %574
    %576 = vrot.lane.b32.xlu0 %v177, 56
    %v577 = vpop.permute.xlu0 %576
    %578 = vrot.lane.b32.xlu0 %v180, 56
    %v579 = vpop.permute.xlu0 %578
    %580 = vrot.lane.b32.xlu0 %v183, 56
    %v581 = vpop.permute.xlu0 %580
    %582 = vrot.lane.b32.xlu0 %v186, 56
    %v583 = vpop.permute.xlu0 %582
    %584 = vrot.lane.b32.xlu0 %v245, 56
    %v585 = vpop.permute.xlu0 %584
    %586 = vrot.lane.b32.xlu0 %v261, 56
    %v587 = vpop.permute.xlu0 %586
    %604 = vrot.lane.b32.xlu0 %v196, 64
    %v605 = vpop.permute.xlu0 %604
    %606 = vrot.lane.b32.xlu0 %v199, 64
    %v607 = vpop.permute.xlu0 %606
    %608 = vrot.lane.b32.xlu0 %v202, 64
    %v609 = vpop.permute.xlu0 %608
    %610 = vrot.lane.b32.xlu0 %v205, 64
    %v611 = vpop.permute.xlu0 %610
    %612 = vrot.lane.b32.xlu0 %v208, 64
    %v613 = vpop.permute.xlu0 %612
    %614 = vrot.lane.b32.xlu0 %v211, 64
    %v615 = vpop.permute.xlu0 %614
    %616 = vrot.lane.b32.xlu0 %v248, 64
    %v617 = vpop.permute.xlu0 %616
    %618 = vrot.lane.b32.xlu0 %v264, 64
    %v619 = vpop.permute.xlu0 %618
    %620 = vrot.lane.b32.xlu0 %v220, 64
    %v621 = vpop.permute.xlu0 %620
    %622 = vrot.lane.b32.xlu0 %v223, 64
    %v623 = vpop.permute.xlu0 %622
    %624 = vrot.lane.b32.xlu0 %v226, 64
    %v625 = vpop.permute.xlu0 %624
    %626 = vrot.lane.b32.xlu0 %v229, 64
    %v627 = vpop.permute.xlu0 %626
    %628 = vrot.lane.b32.xlu0 %v232, 64
    %v629 = vpop.permute.xlu0 %628
    %630 = vrot.lane.b32.xlu0 %v235, 64
    %v631 = vpop.permute.xlu0 %630
    %632 = vrot.lane.b32.xlu0 %v251, 64
    %v633 = vpop.permute.xlu0 %632
    %634 = vrot.lane.b32.xlu0 %v267, 64
    %v635 = vpop.permute.xlu0 %634
    %vm652 = vcmask 64512
    %v653 = vsel %vm652, %v66, %v269
    %v654 = vsel %vm652, %v68, %v271
    %v655 = vsel %vm652, %v70, %v273
    %v656 = vsel %vm652, %v72, %v275
    %v657 = vsel %vm652, %v74, %v277
    %v658 = vsel %vm652, %v76, %v279
    %v659 = vsel %vm652, %v78, %v281
    %v660 = vsel %vm652, %v80, %v283
    %v661 = vsel %vm652, %v86, %v285
    %v662 = vsel %vm652, %v88, %v287
    %v663 = vsel %vm652, %v90, %v289
    %v664 = vsel %vm652, %v92, %v291
    %v665 = vsel %vm652, %v94, %v293
    %v666 = vsel %vm652, %v96, %v295
    %v667 = vsel %vm652, %v98, %v297
    %v668 = vsel %vm652, %v100, %v299
    %vm669 = vcmask 130048
    %v670 = vsel %vm669, %v653, %v317
    %v671 = vsel %vm669, %v654, %v319
    %v672 = vsel %vm669, %v655, %v321
    %v673 = vsel %vm669, %v656, %v323
    %v674 = vsel %vm669, %v657, %v325
    %v675 = vsel %vm669, %v658, %v327
    %v676 = vsel %vm669, %v659, %v329
    %v677 = vsel %vm669, %v660, %v331
    %v678 = vsel %vm669, %v661, %v333
    %v679 = vsel %vm669, %v662, %v335
    %v680 = vsel %vm669, %v663, %v337
    %v681 = vsel %vm669, %v664, %v339
    %v682 = vsel %vm669, %v665, %v341
    %v683 = vsel %vm669, %v666, %v343
    %v684 = vsel %vm669, %v667, %v345
    %v685 = vsel %vm669, %v668, %v347
    %vm686 = vcmask 195584
    %v687 = vsel %vm686, %v670, %v365
    %v688 = vsel %vm686, %v671, %v367
    %v689 = vsel %vm686, %v672, %v369
    %v690 = vsel %vm686, %v673, %v371
    %v691 = vsel %vm686, %v674, %v373
    %v692 = vsel %vm686, %v675, %v375
    %v693 = vsel %vm686, %v676, %v377
    %v694 = vsel %vm686, %v677, %v379
    %v695 = vsel %vm686, %v678, %v381
    %v696 = vsel %vm686, %v679, %v383
    %v697 = vsel %vm686, %v680, %v385
    %v698 = vsel %vm686, %v681, %v387
    %v699 = vsel %vm686, %v682, %v389
    %v700 = vsel %vm686, %v683, %v391
    %v701 = vsel %vm686, %v684, %v393
    %v702 = vsel %vm686, %v685, %v395
    %vm703 = vcmask 261120
    %v704 = vsel %vm703, %v687, %v413
    %v705 = vsel %vm703, %v688, %v415
    %v706 = vsel %vm703, %v689, %v417
    %v707 = vsel %vm703, %v690, %v419
    %v708 = vsel %vm703, %v691, %v421
    %v709 = vsel %vm703, %v692, %v423
    %v710 = vsel %vm703, %v693, %v425
    %v711 = vsel %vm703, %v694, %v427
    %v712 = vsel %vm703, %v695, %v429
    %v713 = vsel %vm703, %v696, %v431
    %v714 = vsel %vm703, %v697, %v433
    %v715 = vsel %vm703, %v698, %v435
    %v716 = vsel %vm703, %v699, %v437
    %v717 = vsel %vm703, %v700, %v439
    %v718 = vsel %vm703, %v701, %v441
    %v719 = vsel %vm703, %v702, %v443
    %vm720 = vcmask 326656
    %v721 = vsel %vm720, %v704, %v461
    %v722 = vsel %vm720, %v705, %v463
    %v723 = vsel %vm720, %v706, %v465
    %v724 = vsel %vm720, %v707, %v467
    %v725 = vsel %vm720, %v708, %v469
    %v726 = vsel %vm720, %v709, %v471
    %v727 = vsel %vm720, %v710, %v473
    %v728 = vsel %vm720, %v711, %v475
    %v729 = vsel %vm720, %v712, %v477
    %v730 = vsel %vm720, %v713, %v479
    %v731 = vsel %vm720, %v714, %v481
    %v732 = vsel %vm720, %v715, %v483
    %v733 = vsel %vm720, %v716, %v485
    %v734 = vsel %vm720, %v717, %v487
    %v735 = vsel %vm720, %v718, %v489
    %v736 = vsel %vm720, %v719, %v491
    %vm737 = vcmask 392192
    %v738 = vsel %vm737, %v721, %v509
    %v739 = vsel %vm737, %v722, %v511
    %v740 = vsel %vm737, %v723, %v513
    %v741 = vsel %vm737, %v724, %v515
    %v742 = vsel %vm737, %v725, %v517
    %v743 = vsel %vm737, %v726, %v519
    %v744 = vsel %vm737, %v727, %v521
    %v745 = vsel %vm737, %v728, %v523
    %v746 = vsel %vm737, %v729, %v525
    %v747 = vsel %vm737, %v730, %v527
    %v748 = vsel %vm737, %v731, %v529
    %v749 = vsel %vm737, %v732, %v531
    %v750 = vsel %vm737, %v733, %v533
    %v751 = vsel %vm737, %v734, %v535
    %v752 = vsel %vm737, %v735, %v537
    %v753 = vsel %vm737, %v736, %v539
    %vm754 = vcmask 457728
    %v755 = vsel %vm754, %v738, %v557
    %v756 = vsel %vm754, %v739, %v559
    %v757 = vsel %vm754, %v740, %v561
    %v758 = vsel %vm754, %v741, %v563
    %v759 = vsel %vm754, %v742, %v565
    %v760 = vsel %vm754, %v743, %v567
    %v761 = vsel %vm754, %v744, %v569
    %v762 = vsel %vm754, %v745, %v571
    %v763 = vsel %vm754, %v746, %v573
    %v764 = vsel %vm754, %v747, %v575
    %v765 = vsel %vm754, %v748, %v577
    %v766 = vsel %vm754, %v749, %v579
    %v767 = vsel %vm754, %v750, %v581
    %v768 = vsel %vm754, %v751, %v583
    %v769 = vsel %vm754, %v752, %v585
    %v770 = vsel %vm754, %v753, %v587
    %vm771 = vcmask 523264
    %v772 = vsel %vm771, %v755, %v605
    %v773 = vsel %vm771, %v756, %v607
    %v774 = vsel %vm771, %v757, %v609
    %v775 = vsel %vm771, %v758, %v611
    %v776 = vsel %vm771, %v759, %v613
    %v777 = vsel %vm771, %v760, %v615
    %v778 = vsel %vm771, %v761, %v617
    %v779 = vsel %vm771, %v762, %v619
    %v780 = vsel %vm771, %v763, %v621
    %v781 = vsel %vm771, %v764, %v623
    %v782 = vsel %vm771, %v765, %v625
    %v783 = vsel %vm771, %v766, %v627
    %v784 = vsel %vm771, %v767, %v629
    %v785 = vsel %vm771, %v768, %v631
    %v786 = vsel %vm771, %v769, %v633
    %v787 = vsel %vm771, %v770, %v635
    %v788 = vpack.c.bf16 %v773, %v772
    %v789 = vpack.c.bf16 %v775, %v774
    %v790 = vpack.c.bf16 %v777, %v776
    %v791 = vpack.c.bf16 %v779, %v778
    %v792 = vpack.c.bf16 %v781, %v780
    %v793 = vpack.c.bf16 %v783, %v782
    %v794 = vpack.c.bf16 %v785, %v784
    %v795 = vpack.c.bf16 %v787, %v786
    %v796 = vld [vmem:[%s2] sm:$0xf]
    %v797 = vld [vmem:[%s2 + $0x4] sm:$0xf]
    %v798 = vld [vmem:[%s2 + $0x8] sm:$0xf]
    %v799 = vld [vmem:[%s2 + $0xc] sm:$0xf]
    %v800 = vld [vmem:[%s2 + $0x10] sm:$0xf]
    %v801 = vld [vmem:[%s2 + $0x14] sm:$0xf]
    %v802 = vld [vmem:[%s2 + $0x18] sm:$0xf]
    %v803 = vld [vmem:[%s2 + $0x1c] sm:$0xf]
    %v804 = vld [vmem:[%s2 + $0x20] sm:$0xf]
    %v814 = vunpack.c.l.b16 %v796
    %v815 = vunpack.c.l.b16 %v797
    %v816 = vunpack.c.l.b16 %v798
    %v817 = vunpack.c.l.b16 %v799
    %v818 = vunpack.c.l.b16 %v800
    %v819 = vunpack.c.l.b16 %v801
    %v820 = vunpack.c.l.b16 %v802
    %v821 = vunpack.c.l.b16 %v803
    %v822 = vunpack.c.l.b16 %v804
    %v823 = vpack.c.b16 %v815, %v814
    %v824 = vpack.c.b16 %v817, %v816
    %v825 = vpack.c.b16 %v819, %v818
    %v826 = vpack.c.b16 %v821, %v820
    %v827 = vpack.c.b16 %v822, %v822
    %vm832 = vcmask 588800
    %v834 = vsel %vm832, %v788, 0
    %v837 = vsel %vm832, %v789, 0
    %v840 = vsel %vm832, %v790, 0
    %v843 = vsel %vm832, %v791, 0
    %v846 = vsel %vm832, %v792, 0
    %v849 = vsel %vm832, %v793, 0
    %v852 = vsel %vm832, %v794, 0
    %v855 = vsel %vm832, %v795, 0
    %vm857 = vcmask 1043456
    %v859 = vsel %vm857, %v827, 0
    %861 = vmatprep.subr.bf16.mxu0 0
    %862 = vmatpush1.bf16.msra.mxu0 %v823
    %863 = vmatprep.subr.bf16.mxu0 0
    %864 = vmatpush1.bf16.msra.mxu0 %v824
    %865 = vmatprep.subr.bf16.mxu0 0
    %866 = vmatpush1.bf16.msra.mxu0 %v825
    %867 = vmatprep.subr.bf16.mxu0 0
    %868 = vmatpush1.bf16.msra.mxu0 %v826
    %869 = vmatprep.subr.bf16.mxu0 0
    %870 = vmatpush1.bf16.msra.mxu0 %v859
    %871 = vmatprep.subr.bf16.mxu0 0
    %872 = vmatpush1.bf16.msra.mxu0 0
    %873 = vmatprep.subr.bf16.mxu0 0
    %874 = vmatpush1.bf16.msra.mxu0 0
    %875 = vmatprep.subr.bf16.mxu0 0
    %876 = vmatpush1.bf16.msra.mxu0 0
    %877 = vmatprep.subr.bf16.mxu0 0
    %878 = vmatpush1.bf16.msra.mxu0 0
    %879 = vmatprep.subr.bf16.mxu0 0
    %880 = vmatpush1.bf16.msra.mxu0 0
    %881 = vmatprep.subr.bf16.mxu0 0
    %882 = vmatpush1.bf16.msra.mxu0 0
    %883 = vmatprep.subr.bf16.mxu0 0
    %884 = vmatpush1.bf16.msra.mxu0 0
    %885 = vmatprep.subr.bf16.mxu0 0
    %886 = vmatpush1.bf16.msra.mxu0 0
    %887 = vmatprep.subr.bf16.mxu0 0
    %888 = vmatpush1.bf16.msra.mxu0 0
    %889 = vmatprep.subr.bf16.mxu0 0
    %890 = vmatpush1.bf16.msra.mxu0 0
    %891 = vmatprep.subr.bf16.mxu0 0
    %892 = vmatpush1.bf16.msra.mxu0 0
    %893 = vmatprep.mubr.bf16.mxu0 0
    %894 = vmatmul.mubr.bf16.gmra.mrb[0].mxu0 %v834
    %v895 = vpop.f32.mrb[0].mxu0
    %v896 = vadd.f32 0.0, %v895
    %v897 = vpop.f32.mrb[0].mxu0
    %v898 = vpop.f32.mrb[0].mxu0
    %v899 = vadd.f32 0.0, %v898
    %v900 = vpop.f32.mrb[0].mxu0
    %901 = vmatprep.mubr.bf16.mxu0 0
    %902 = vmatmul.mubr.bf16.gmra.mrb[0].mxu0 %v837
    %v903 = vpop.f32.mrb[0].mxu0
    %v904 = vadd.f32 0.0, %v903
    %v905 = vpop.f32.mrb[0].mxu0
    %v906 = vpop.f32.mrb[0].mxu0
    %v907 = vadd.f32 0.0, %v906
    %v908 = vpop.f32.mrb[0].mxu0
    %909 = vmatprep.mubr.bf16.mxu0 0
    %910 = vmatmul.mubr.bf16.gmra.mrb[0].mxu0 %v840
    %v911 = vpop.f32.mrb[0].mxu0
    %v912 = vadd.f32 0.0, %v911
    %v913 = vpop.f32.mrb[0].mxu0
    %v914 = vpop.f32.mrb[0].mxu0
    %v915 = vadd.f32 0.0, %v914
    %v916 = vpop.f32.mrb[0].mxu0
    %917 = vmatprep.mubr.bf16.mxu0 0
    %918 = vmatmul.mubr.bf16.gmra.mrb[0].mxu0 %v843
    %v919 = vpop.f32.mrb[0].mxu0
    %v920 = vadd.f32 0.0, %v919
    %v921 = vpop.f32.mrb[0].mxu0
    %v922 = vpop.f32.mrb[0].mxu0
    %v923 = vadd.f32 0.0, %v922
    %v924 = vpop.f32.mrb[0].mxu0
    %925 = vmatprep.mubr.bf16.mxu0 0
    %926 = vmatmul.mubr.bf16.gmra.mrb[0].mxu0 %v846
    %v927 = vpop.f32.mrb[0].mxu0
    %v928 = vadd.f32 0.0, %v927
    %v929 = vpop.f32.mrb[0].mxu0
    %v930 = vpop.f32.mrb[0].mxu0
    %v931 = vadd.f32 0.0, %v930
    %v932 = vpop.f32.mrb[0].mxu0
    %933 = vmatprep.mubr.bf16.mxu0 0
    %934 = vmatmul.mubr.bf16.gmra.mrb[0].mxu0 %v849
    %v935 = vpop.f32.mrb[0].mxu0
    %v936 = vadd.f32 0.0, %v935
    %v937 = vpop.f32.mrb[0].mxu0
    %v938 = vpop.f32.mrb[0].mxu0
    %v939 = vadd.f32 0.0, %v938
    %v940 = vpop.f32.mrb[0].mxu0
    %941 = vmatprep.mubr.bf16.mxu0 0
    %942 = vmatmul.mubr.bf16.gmra.mrb[0].mxu0 %v852
    %v943 = vpop.f32.mrb[0].mxu0
    %v944 = vadd.f32 0.0, %v943
    %v945 = vpop.f32.mrb[0].mxu0
    %v946 = vpop.f32.mrb[0].mxu0
    %v947 = vadd.f32 0.0, %v946
    %v948 = vpop.f32.mrb[0].mxu0
    %949 = vmatprep.mubr.bf16.mxu0 0
    %950 = vmatmul.mubr.bf16.gmra.mrb[0].mxu0 %v855
    %v951 = vpop.f32.mrb[0].mxu0
    %v952 = vadd.f32 0.0, %v951
    %v953 = vpop.f32.mrb[0].mxu0
    %v954 = vpop.f32.mrb[0].mxu0
    %v955 = vadd.f32 0.0, %v954
    %v956 = vpop.f32.mrb[0].mxu0
    %957 = vdwg.mxu0
    %v958 = vlaneseq
    %v959 = vshrl.u32 %v958, 7
    %v960 = vsub.s32 0, %v959
    %v961 = vrot.slane %v22, %v960
    %v962 = vmul.f32 %v896, %v961
    %v963 = vmul.f32 %v899, %v961
    %v964 = vmul.f32 %v904, %v961
    %v965 = vmul.f32 %v907, %v961
    %v966 = vmul.f32 %v912, %v961
    %v967 = vmul.f32 %v915, %v961
    %v968 = vmul.f32 %v920, %v961
    %v969 = vmul.f32 %v923, %v961
    %v970 = vmul.f32 %v928, %v961
    %v971 = vmul.f32 %v931, %v961
    %v972 = vmul.f32 %v936, %v961
    %v973 = vmul.f32 %v939, %v961
    %v974 = vmul.f32 %v944, %v961
    %v975 = vmul.f32 %v947, %v961
    %v976 = vmul.f32 %v952, %v961
    %v977 = vmul.f32 %v955, %v961
    %v978 = vlaneseq
    %v979 = vshrl.u32 %v978, 7
    %v980 = vsub.s32 0, %v979
    %v981 = vrot.slane %v23, %v980
    %v982 = vadd.f32 %v962, %v981
    %v983 = vadd.f32 %v963, %v981
    %v984 = vadd.f32 %v964, %v981
    %v985 = vadd.f32 %v965, %v981
    %v986 = vadd.f32 %v966, %v981
    %v987 = vadd.f32 %v967, %v981
    %v988 = vadd.f32 %v968, %v981
    %v989 = vadd.f32 %v969, %v981
    %v990 = vadd.f32 %v970, %v981
    %v991 = vadd.f32 %v971, %v981
    %v992 = vadd.f32 %v972, %v981
    %v993 = vadd.f32 %v973, %v981
    %v994 = vadd.f32 %v974, %v981
    %v995 = vadd.f32 %v975, %v981
    %v996 = vadd.f32 %v976, %v981
    %v997 = vadd.f32 %v977, %v981
    %v998 = vmax.f32 %v982, 0.0
    %v999 = vmax.f32 %v983, 0.0
    %v1000 = vmax.f32 %v984, 0.0
    %v1001 = vmax.f32 %v985, 0.0
    %v1002 = vmax.f32 %v986, 0.0
    %v1003 = vmax.f32 %v987, 0.0
    %v1004 = vmax.f32 %v988, 0.0
    %v1005 = vmax.f32 %v989, 0.0
    %v1006 = vmax.f32 %v990, 0.0
    %v1007 = vmax.f32 %v991, 0.0
    %v1008 = vmax.f32 %v992, 0.0
    %v1009 = vmax.f32 %v993, 0.0
    %v1010 = vmax.f32 %v994, 0.0
    %v1011 = vmax.f32 %v995, 0.0
    %v1012 = vmax.f32 %v996, 0.0
    %v1013 = vmax.f32 %v997, 0.0
    %1014 = vst.msk [vmem:[#allocation2] sm:$0xff] %vm652, 0.0
    %vm1015 = vcmask 58368
    %1016 = vst.msk [vmem:[#allocation2 + $0x8] sm:$0x3] %vm1015, 0.0
    %1017 = vst.msk [vmem:[#allocation2 + $0xa0] sm:$0xff] %vm652, 0.0
    %1018 = vst.msk [vmem:[#allocation2 + $0xa8] sm:$0x3] %vm1015, 0.0
    %s1019 = scalar_lea.vmem [#allocation2], 144
    %1020 = vst.msk [vmem:[%s1019] sm:$0xff] %vm652, 0.0
    %1021 = vst.msk [vmem:[%s1019 + $0x8] sm:$0x3] %vm1015, 0.0
    %1022 = vst.msk [vmem:[%s1019 + $0xa0] sm:$0xff] %vm652, 0.0
    %1023 = vst.msk [vmem:[%s1019 + $0xa8] sm:$0x3] %vm1015, 0.0
    %vm1024 = vcmask 57344
    %1025 = vst.msk [vmem:[#allocation2] sm:$0x1] %vm1024, 0.0
    %1026 = vst.msk [vmem:[#allocation2 + $0x10] sm:$0x1] %vm1024, 0.0
    %1027 = vst.msk [vmem:[#allocation2 + $0x20] sm:$0x1] %vm1024, 0.0
    %1028 = vst.msk [vmem:[#allocation2 + $0x30] sm:$0x1] %vm1024, 0.0
    %1029 = vst.msk [vmem:[#allocation2 + $0x40] sm:$0x1] %vm1024, 0.0
    %1030 = vst.msk [vmem:[#allocation2 + $0x50] sm:$0x1] %vm1024, 0.0
    %1031 = vst.msk [vmem:[#allocation2 + $0x60] sm:$0x1] %vm1024, 0.0
    %1032 = vst.msk [vmem:[#allocation2 + $0x70] sm:$0x1] %vm1024, 0.0
    %1033 = vst.msk [vmem:[#allocation2 + $0x80] sm:$0x1] %vm1024, 0.0
    %1034 = vst.msk [vmem:[#allocation2 + $0x90] sm:$0x1] %vm1024, 0.0
    %1035 = vst.msk [vmem:[#allocation2 + $0xa0] sm:$0x1] %vm1024, 0.0
    %1036 = vst.msk [vmem:[#allocation2 + $0xb0] sm:$0x1] %vm1024, 0.0
    %1037 = vst.msk [vmem:[#allocation2 + $0xc0] sm:$0x1] %vm1024, 0.0
    %1038 = vst.msk [vmem:[#allocation2 + $0xd0] sm:$0x1] %vm1024, 0.0
    %1039 = vst.msk [vmem:[#allocation2 + $0xe0] sm:$0x1] %vm1024, 0.0
    %1040 = vst.msk [vmem:[#allocation2 + $0xf0] sm:$0x1] %vm1024, 0.0
    %1041 = vst.msk [vmem:[#allocation2 + $0x100] sm:$0x1] %vm1024, 0.0
    %1042 = vst.msk [vmem:[#allocation2 + $0x110] sm:$0x1] %vm1024, 0.0
    %1043 = vst.msk [vmem:[#allocation2 + $0x120] sm:$0x1] %vm1024, 0.0
    %1044 = vst.msk [vmem:[#allocation2 + $0x130] sm:$0x1] %vm1024, 0.0
    %1045 = vst.msk [vmem:[#allocation2 + $0x9] sm:$0x1] %vm1024, 0.0
    %1046 = vst.msk [vmem:[#allocation2 + $0x19] sm:$0x1] %vm1024, 0.0
    %1047 = vst.msk [vmem:[#allocation2 + $0x29] sm:$0x1] %vm1024, 0.0
    %1048 = vst.msk [vmem:[#allocation2 + $0x39] sm:$0x1] %vm1024, 0.0
    %1049 = vst.msk [vmem:[#allocation2 + $0x49] sm:$0x1] %vm1024, 0.0
    %1050 = vst.msk [vmem:[#allocation2 + $0x59] sm:$0x1] %vm1024, 0.0
    %1051 = vst.msk [vmem:[#allocation2 + $0x69] sm:$0x1] %vm1024, 0.0
    %1052 = vst.msk [vmem:[#allocation2 + $0x79] sm:$0x1] %vm1024, 0.0
    %1053 = vst.msk [vmem:[#allocation2 + $0x89] sm:$0x1] %vm1024, 0.0
    %1054 = vst.msk [vmem:[#allocation2 + $0x99] sm:$0x1] %vm1024, 0.0
    %1055 = vst.msk [vmem:[#allocation2 + $0xa9] sm:$0x1] %vm1024, 0.0
    %1056 = vst.msk [vmem:[#allocation2 + $0xb9] sm:$0x1] %vm1024, 0.0
    %1057 = vst.msk [vmem:[#allocation2 + $0xc9] sm:$0x1] %vm1024, 0.0
    %1058 = vst.msk [vmem:[#allocation2 + $0xd9] sm:$0x1] %vm1024, 0.0
    %1059 = vst.msk [vmem:[#allocation2 + $0xe9] sm:$0x1] %vm1024, 0.0
    %1060 = vst.msk [vmem:[#allocation2 + $0xf9] sm:$0x1] %vm1024, 0.0
    %1061 = vst.msk [vmem:[#allocation2 + $0x109] sm:$0x1] %vm1024, 0.0
    %1062 = vst.msk [vmem:[#allocation2 + $0x119] sm:$0x1] %vm1024, 0.0
    %1063 = vst.msk [vmem:[#allocation2 + $0x129] sm:$0x1] %vm1024, 0.0
    %1064 = vst.msk [vmem:[#allocation2 + $0x139] sm:$0x1] %vm1024, 0.0
    %s1065 = scalar_lea.vmem [#allocation2], 16
    %1066 = vst.msk [vmem:[%s1065 + $0x1] sm:$0xff] %vm652, %v998
    %1067 = vst.msk [vmem:[%s1065 + $0x11] sm:$0xff] %vm652, %v999
    %1068 = vst.msk [vmem:[%s1065 + $0x21] sm:$0xff] %vm652, %v1000
    %1069 = vst.msk [vmem:[%s1065 + $0x31] sm:$0xff] %vm652, %v1001
    %1070 = vst.msk [vmem:[%s1065 + $0x41] sm:$0xff] %vm652, %v1002
    %1071 = vst.msk [vmem:[%s1065 + $0x51] sm:$0xff] %vm652, %v1003
    %1072 = vst.msk [vmem:[%s1065 + $0x61] sm:$0xff] %vm652, %v1004
    %1073 = vst.msk [vmem:[%s1065 + $0x71] sm:$0xff] %vm652, %v1005
    %1074 = vst.msk [vmem:[%s1065 + $0xa1] sm:$0xff] %vm652, %v1006
    %1075 = vst.msk [vmem:[%s1065 + $0xb1] sm:$0xff] %vm652, %v1007
    %1076 = vst.msk [vmem:[%s1065 + $0xc1] sm:$0xff] %vm652, %v1008
    %1077 = vst.msk [vmem:[%s1065 + $0xd1] sm:$0xff] %vm652, %v1009
    %1078 = vst.msk [vmem:[%s1065 + $0xe1] sm:$0xff] %vm652, %v1010
    %1079 = vst.msk [vmem:[%s1065 + $0xf1] sm:$0xff] %vm652, %v1011
    %1080 = vst.msk [vmem:[%s1065 + $0x101] sm:$0xff] %vm652, %v1012
    %1081 = vst.msk [vmem:[%s1065 + $0x111] sm:$0xff] %vm652, %v1013
    %v1082 = vld [vmem:[#allocation2] sm:$0xff]
    %v1083 = vld [vmem:[#allocation2 + $0x8] sm:$0x3]
    %v1084 = vld [vmem:[#allocation2 + $0x10] sm:$0xff]
    %v1085 = vld [vmem:[#allocation2 + $0x18] sm:$0x3]
    %v1086 = vld [vmem:[#allocation2 + $0x20] sm:$0xff]
    %v1087 = vld [vmem:[#allocation2 + $0x28] sm:$0x3]
    %v1088 = vld [vmem:[#allocation2 + $0x30] sm:$0xff]
    %v1089 = vld [vmem:[#allocation2 + $0x38] sm:$0x3]
    %v1090 = vld [vmem:[#allocation2 + $0x40] sm:$0xff]
    %v1091 = vld [vmem:[#allocation2 + $0x48] sm:$0x3]
    %v1092 = vld [vmem:[#allocation2 + $0x50] sm:$0xff]
    %v1093 = vld [vmem:[#allocation2 + $0x58] sm:$0x3]
    %v1094 = vld [vmem:[#allocation2 + $0x60] sm:$0xff]
    %v1095 = vld [vmem:[#allocation2 + $0x68] sm:$0x3]
    %v1096 = vld [vmem:[#allocation2 + $0x70] sm:$0xff]
    %v1097 = vld [vmem:[#allocation2 + $0x78] sm:$0x3]
    %v1098 = vld [vmem:[#allocation2 + $0x80] sm:$0xff]
    %v1099 = vld [vmem:[#allocation2 + $0x88] sm:$0x3]
    %v1100 = vld [vmem:[#allocation2 + $0x90] sm:$0xff]
    %v1101 = vld [vmem:[#allocation2 + $0x98] sm:$0x3]
    %v1102 = vld [vmem:[#allocation2 + $0xa0] sm:$0xff]
    %v1103 = vld [vmem:[#allocation2 + $0xa8] sm:$0x3]
    %v1104 = vld [vmem:[#allocation2 + $0xb0] sm:$0xff]
    %v1105 = vld [vmem:[#allocation2 + $0xb8] sm:$0x3]
    %v1106 = vld [vmem:[#allocation2 + $0xc0] sm:$0xff]
    %v1107 = vld [vmem:[#allocation2 + $0xc8] sm:$0x3]
    %v1108 = vld [vmem:[#allocation2 + $0xd0] sm:$0xff]
    %v1109 = vld [vmem:[#allocation2 + $0xd8] sm:$0x3]
    %v1110 = vld [vmem:[#allocation2 + $0xe0] sm:$0xff]
    %v1111 = vld [vmem:[#allocation2 + $0xe8] sm:$0x3]
    %v1112 = vld [vmem:[#allocation2 + $0xf0] sm:$0xff]
    %v1113 = vld [vmem:[#allocation2 + $0xf8] sm:$0x3]
    %v1114 = vld [vmem:[#allocation2 + $0x100] sm:$0xff]
    %v1115 = vld [vmem:[#allocation2 + $0x108] sm:$0x3]
    %v1116 = vld [vmem:[#allocation2 + $0x110] sm:$0xff]
    %v1117 = vld [vmem:[#allocation2 + $0x118] sm:$0x3]
    %v1118 = vld [vmem:[#allocation2 + $0x120] sm:$0xff]
    %v1119 = vld [vmem:[#allocation2 + $0x128] sm:$0x3]
    %v1120 = vld [vmem:[#allocation2 + $0x130] sm:$0xff]
    %v1121 = vld [vmem:[#allocation2 + $0x138] sm:$0x3]
    %v1154 = vrot.slane %v1082, 1
    %v1155 = vrot.slane %v1083, 1
    %v1156 = vsel %vm138, %v1154, %v1155
    %v1157 = vrot.slane %v1084, 1
    %v1158 = vrot.slane %v1085, 1
    %v1159 = vsel %vm138, %v1157, %v1158
    %v1160 = vrot.slane %v1086, 1
    %v1161 = vrot.slane %v1087, 1
    %v1162 = vsel %vm138, %v1160, %v1161
    %v1163 = vrot.slane %v1088, 1
    %v1164 = vrot.slane %v1089, 1
    %v1165 = vsel %vm138, %v1163, %v1164
    %v1166 = vrot.slane %v1090, 1
    %v1167 = vrot.slane %v1091, 1
    %v1168 = vsel %vm138, %v1166, %v1167
    %v1169 = vrot.slane %v1092, 1
    %v1170 = vrot.slane %v1093, 1
    %v1171 = vsel %vm138, %v1169, %v1170
    %v1172 = vrot.slane %v1094, 1
    %v1173 = vrot.slane %v1095, 1
    %v1174 = vsel %vm138, %v1172, %v1173
    %v1175 = vrot.slane %v1096, 1
    %v1176 = vrot.slane %v1097, 1
    %v1177 = vsel %vm138, %v1175, %v1176
    %v1178 = vrot.slane %v1102, 1
    %v1179 = vrot.slane %v1103, 1
    %v1180 = vsel %vm138, %v1178, %v1179
    %v1181 = vrot.slane %v1104, 1
    %v1182 = vrot.slane %v1105, 1
    %v1183 = vsel %vm138, %v1181, %v1182
    %v1184 = vrot.slane %v1106, 1
    %v1185 = vrot.slane %v1107, 1
    %v1186 = vsel %vm138, %v1184, %v1185
    %v1187 = vrot.slane %v1108, 1
    %v1188 = vrot.slane %v1109, 1
    %v1189 = vsel %vm138, %v1187, %v1188
    %v1190 = vrot.slane %v1110, 1
    %v1191 = vrot.slane %v1111, 1
    %v1192 = vsel %vm138, %v1190, %v1191
    %v1193 = vrot.slane %v1112, 1
    %v1194 = vrot.slane %v1113, 1
    %v1195 = vsel %vm138, %v1193, %v1194
    %v1196 = vrot.slane %v1114, 1
    %v1197 = vrot.slane %v1115, 1
    %v1198 = vsel %vm138, %v1196, %v1197
    %v1199 = vrot.slane %v1116, 1
    %v1200 = vrot.slane %v1117, 1
    %v1201 = vsel %vm138, %v1199, %v1200
    %v1202 = vrot.slane %v1082, 2
    %v1203 = vrot.slane %v1083, 2
    %v1204 = vsel %vm187, %v1202, %v1203
    %v1205 = vrot.slane %v1084, 2
    %v1206 = vrot.slane %v1085, 2
    %v1207 = vsel %vm187, %v1205, %v1206
    %v1208 = vrot.slane %v1086, 2
    %v1209 = vrot.slane %v1087, 2
    %v1210 = vsel %vm187, %v1208, %v1209
    %v1211 = vrot.slane %v1088, 2
    %v1212 = vrot.slane %v1089, 2
    %v1213 = vsel %vm187, %v1211, %v1212
    %v1214 = vrot.slane %v1090, 2
    %v1215 = vrot.slane %v1091, 2
    %v1216 = vsel %vm187, %v1214, %v1215
    %v1217 = vrot.slane %v1092, 2
    %v1218 = vrot.slane %v1093, 2
    %v1219 = vsel %vm187, %v1217, %v1218
    %v1220 = vrot.slane %v1094, 2
    %v1221 = vrot.slane %v1095, 2
    %v1222 = vsel %vm187, %v1220, %v1221
    %v1223 = vrot.slane %v1096, 2
    %v1224 = vrot.slane %v1097, 2
    %v1225 = vsel %vm187, %v1223, %v1224
    %v1226 = vrot.slane %v1102, 2
    %v1227 = vrot.slane %v1103, 2
    %v1228 = vsel %vm187, %v1226, %v1227
    %v1229 = vrot.slane %v1104, 2
    %v1230 = vrot.slane %v1105, 2
    %v1231 = vsel %vm187, %v1229, %v1230
    %v1232 = vrot.slane %v1106, 2
    %v1233 = vrot.slane %v1107, 2
    %v1234 = vsel %vm187, %v1232, %v1233
    %v1235 = vrot.slane %v1108, 2
    %v1236 = vrot.slane %v1109, 2
    %v1237 = vsel %vm187, %v1235, %v1236
    %v1238 = vrot.slane %v1110, 2
    %v1239 = vrot.slane %v1111, 2
    %v1240 = vsel %vm187, %v1238, %v1239
    %v1241 = vrot.slane %v1112, 2
    %v1242 = vrot.slane %v1113, 2
    %v1243 = vsel %vm187, %v1241, %v1242
    %v1244 = vrot.slane %v1114, 2
    %v1245 = vrot.slane %v1115, 2
    %v1246 = vsel %vm187, %v1244, %v1245
    %v1247 = vrot.slane %v1116, 2
    %v1248 = vrot.slane %v1117, 2
    %v1249 = vsel %vm187, %v1247, %v1248
    %v1254 = vrot.slane %v1098, 1
    %v1255 = vrot.slane %v1099, 1
    %v1256 = vsel %vm138, %v1254, %v1255
    %v1257 = vrot.slane %v1118, 1
    %v1258 = vrot.slane %v1119, 1
    %v1259 = vsel %vm138, %v1257, %v1258
    %v1260 = vrot.slane %v1098, 2
    %v1261 = vrot.slane %v1099, 2
    %v1262 = vsel %vm187, %v1260, %v1261
    %v1263 = vrot.slane %v1118, 2
    %v1264 = vrot.slane %v1119, 2
    %v1265 = vsel %vm187, %v1263, %v1264
    %v1270 = vrot.slane %v1100, 1
    %v1271 = vrot.slane %v1101, 1
    %v1272 = vsel %vm138, %v1270, %v1271
    %v1273 = vrot.slane %v1120, 1
    %v1274 = vrot.slane %v1121, 1
    %v1275 = vsel %vm138, %v1273, %v1274
    %v1276 = vrot.slane %v1100, 2
    %v1277 = vrot.slane %v1101, 2
    %v1278 = vsel %vm187, %v1276, %v1277
    %v1279 = vrot.slane %v1120, 2
    %v1280 = vrot.slane %v1121, 2
    %v1281 = vsel %vm187, %v1279, %v1280
    %1282 = vrot.lane.b32.xlu0 %v1156, 8
    %v1283 = vpop.permute.xlu0 %1282
    %1284 = vrot.lane.b32.xlu0 %v1159, 8
    %v1285 = vpop.permute.xlu0 %1284
    %1286 = vrot.lane.b32.xlu0 %v1162, 8
    %v1287 = vpop.permute.xlu0 %1286
    %1288 = vrot.lane.b32.xlu0 %v1165, 8
    %v1289 = vpop.permute.xlu0 %1288
    %1290 = vrot.lane.b32.xlu0 %v1168, 8
    %v1291 = vpop.permute.xlu0 %1290
    %1292 = vrot.lane.b32.xlu0 %v1171, 8
    %v1293 = vpop.permute.xlu0 %1292
    %1294 = vrot.lane.b32.xlu0 %v1174, 8
    %v1295 = vpop.permute.xlu0 %1294
    %1296 = vrot.lane.b32.xlu0 %v1177, 8
    %v1297 = vpop.permute.xlu0 %1296
    %1298 = vrot.lane.b32.xlu0 %v1180, 8
    %v1299 = vpop.permute.xlu0 %1298
    %1300 = vrot.lane.b32.xlu0 %v1183, 8
    %v1301 = vpop.permute.xlu0 %1300
    %1302 = vrot.lane.b32.xlu0 %v1186, 8
    %v1303 = vpop.permute.xlu0 %1302
    %1304 = vrot.lane.b32.xlu0 %v1189, 8
    %v1305 = vpop.permute.xlu0 %1304
    %1306 = vrot.lane.b32.xlu0 %v1192, 8
    %v1307 = vpop.permute.xlu0 %1306
    %1308 = vrot.lane.b32.xlu0 %v1195, 8
    %v1309 = vpop.permute.xlu0 %1308
    %1310 = vrot.lane.b32.xlu0 %v1198, 8
    %v1311 = vpop.permute.xlu0 %1310
    %1312 = vrot.lane.b32.xlu0 %v1201, 8
    %v1313 = vpop.permute.xlu0 %1312
    %1330 = vrot.lane.b32.xlu0 %v1204, 16
    %v1331 = vpop.permute.xlu0 %1330
    %1332 = vrot.lane.b32.xlu0 %v1207, 16
    %v1333 = vpop.permute.xlu0 %1332
    %1334 = vrot.lane.b32.xlu0 %v1210, 16
    %v1335 = vpop.permute.xlu0 %1334
    %1336 = vrot.lane.b32.xlu0 %v1213, 16
    %v1337 = vpop.permute.xlu0 %1336
    %1338 = vrot.lane.b32.xlu0 %v1216, 16
    %v1339 = vpop.permute.xlu0 %1338
    %1340 = vrot.lane.b32.xlu0 %v1219, 16
    %v1341 = vpop.permute.xlu0 %1340
    %1342 = vrot.lane.b32.xlu0 %v1222, 16
    %v1343 = vpop.permute.xlu0 %1342
    %1344 = vrot.lane.b32.xlu0 %v1225, 16
    %v1345 = vpop.permute.xlu0 %1344
    %1346 = vrot.lane.b32.xlu0 %v1228, 16
    %v1347 = vpop.permute.xlu0 %1346
    %1348 = vrot.lane.b32.xlu0 %v1231, 16
    %v1349 = vpop.permute.xlu0 %1348
    %1350 = vrot.lane.b32.xlu0 %v1234, 16
    %v1351 = vpop.permute.xlu0 %1350
    %1352 = vrot.lane.b32.xlu0 %v1237, 16
    %v1353 = vpop.permute.xlu0 %1352
    %1354 = vrot.lane.b32.xlu0 %v1240, 16
    %v1355 = vpop.permute.xlu0 %1354
    %1356 = vrot.lane.b32.xlu0 %v1243, 16
    %v1357 = vpop.permute.xlu0 %1356
    %1358 = vrot.lane.b32.xlu0 %v1246, 16
    %v1359 = vpop.permute.xlu0 %1358
    %1360 = vrot.lane.b32.xlu0 %v1249, 16
    %v1361 = vpop.permute.xlu0 %1360
    %1378 = vrot.lane.b32.xlu0 %v1084, 24
    %v1379 = vpop.permute.xlu0 %1378
    %1380 = vrot.lane.b32.xlu0 %v1086, 24
    %v1381 = vpop.permute.xlu0 %1380
    %1382 = vrot.lane.b32.xlu0 %v1088, 24
    %v1383 = vpop.permute.xlu0 %1382
    %1384 = vrot.lane.b32.xlu0 %v1090, 24
    %v1385 = vpop.permute.xlu0 %1384
    %1386 = vrot.lane.b32.xlu0 %v1092, 24
    %v1387 = vpop.permute.xlu0 %1386
    %1388 = vrot.lane.b32.xlu0 %v1094, 24
    %v1389 = vpop.permute.xlu0 %1388
    %1390 = vrot.lane.b32.xlu0 %v1096, 24
    %v1391 = vpop.permute.xlu0 %1390
    %1392 = vrot.lane.b32.xlu0 %v1098, 24
    %v1393 = vpop.permute.xlu0 %1392
    %1394 = vrot.lane.b32.xlu0 %v1104, 24
    %v1395 = vpop.permute.xlu0 %1394
    %1396 = vrot.lane.b32.xlu0 %v1106, 24
    %v1397 = vpop.permute.xlu0 %1396
    %1398 = vrot.lane.b32.xlu0 %v1108, 24
    %v1399 = vpop.permute.xlu0 %1398
    %1400 = vrot.lane.b32.xlu0 %v1110, 24
    %v1401 = vpop.permute.xlu0 %1400
    %1402 = vrot.lane.b32.xlu0 %v1112, 24
    %v1403 = vpop.permute.xlu0 %1402
    %1404 = vrot.lane.b32.xlu0 %v1114, 24
    %v1405 = vpop.permute.xlu0 %1404
    %1406 = vrot.lane.b32.xlu0 %v1116, 24
    %v1407 = vpop.permute.xlu0 %1406
    %1408 = vrot.lane.b32.xlu0 %v1118, 24
    %v1409 = vpop.permute.xlu0 %1408
    %1426 = vrot.lane.b32.xlu0 %v1159, 32
    %v1427 = vpop.permute.xlu0 %1426
    %1428 = vrot.lane.b32.xlu0 %v1162, 32
    %v1429 = vpop.permute.xlu0 %1428
    %1430 = vrot.lane.b32.xlu0 %v1165, 32
    %v1431 = vpop.permute.xlu0 %1430
    %1432 = vrot.lane.b32.xlu0 %v1168, 32
    %v1433 = vpop.permute.xlu0 %1432
    %1434 = vrot.lane.b32.xlu0 %v1171, 32
    %v1435 = vpop.permute.xlu0 %1434
    %1436 = vrot.lane.b32.xlu0 %v1174, 32
    %v1437 = vpop.permute.xlu0 %1436
    %1438 = vrot.lane.b32.xlu0 %v1177, 32
    %v1439 = vpop.permute.xlu0 %1438
    %1440 = vrot.lane.b32.xlu0 %v1256, 32
    %v1441 = vpop.permute.xlu0 %1440
    %1442 = vrot.lane.b32.xlu0 %v1183, 32
    %v1443 = vpop.permute.xlu0 %1442
    %1444 = vrot.lane.b32.xlu0 %v1186, 32
    %v1445 = vpop.permute.xlu0 %1444
    %1446 = vrot.lane.b32.xlu0 %v1189, 32
    %v1447 = vpop.permute.xlu0 %1446
    %1448 = vrot.lane.b32.xlu0 %v1192, 32
    %v1449 = vpop.permute.xlu0 %1448
    %1450 = vrot.lane.b32.xlu0 %v1195, 32
    %v1451 = vpop.permute.xlu0 %1450
    %1452 = vrot.lane.b32.xlu0 %v1198, 32
    %v1453 = vpop.permute.xlu0 %1452
    %1454 = vrot.lane.b32.xlu0 %v1201, 32
    %v1455 = vpop.permute.xlu0 %1454
    %1456 = vrot.lane.b32.xlu0 %v1259, 32
    %v1457 = vpop.permute.xlu0 %1456
    %1474 = vrot.lane.b32.xlu0 %v1207, 40
    %v1475 = vpop.permute.xlu0 %1474
    %1476 = vrot.lane.b32.xlu0 %v1210, 40
    %v1477 = vpop.permute.xlu0 %1476
    %1478 = vrot.lane.b32.xlu0 %v1213, 40
    %v1479 = vpop.permute.xlu0 %1478
    %1480 = vrot.lane.b32.xlu0 %v1216, 40
    %v1481 = vpop.permute.xlu0 %1480
    %1482 = vrot.lane.b32.xlu0 %v1219, 40
    %v1483 = vpop.permute.xlu0 %1482
    %1484 = vrot.lane.b32.xlu0 %v1222, 40
    %v1485 = vpop.permute.xlu0 %1484
    %1486 = vrot.lane.b32.xlu0 %v1225, 40
    %v1487 = vpop.permute.xlu0 %1486
    %1488 = vrot.lane.b32.xlu0 %v1262, 40
    %v1489 = vpop.permute.xlu0 %1488
    %1490 = vrot.lane.b32.xlu0 %v1231, 40
    %v1491 = vpop.permute.xlu0 %1490
    %1492 = vrot.lane.b32.xlu0 %v1234, 40
    %v1493 = vpop.permute.xlu0 %1492
    %1494 = vrot.lane.b32.xlu0 %v1237, 40
    %v1495 = vpop.permute.xlu0 %1494
    %1496 = vrot.lane.b32.xlu0 %v1240, 40
    %v1497 = vpop.permute.xlu0 %1496
    %1498 = vrot.lane.b32.xlu0 %v1243, 40
    %v1499 = vpop.permute.xlu0 %1498
    %1500 = vrot.lane.b32.xlu0 %v1246, 40
    %v1501 = vpop.permute.xlu0 %1500
    %1502 = vrot.lane.b32.xlu0 %v1249, 40
    %v1503 = vpop.permute.xlu0 %1502
    %1504 = vrot.lane.b32.xlu0 %v1265, 40
    %v1505 = vpop.permute.xlu0 %1504
    %1522 = vrot.lane.b32.xlu0 %v1086, 48
    %v1523 = vpop.permute.xlu0 %1522
    %1524 = vrot.lane.b32.xlu0 %v1088, 48
    %v1525 = vpop.permute.xlu0 %1524
    %1526 = vrot.lane.b32.xlu0 %v1090, 48
    %v1527 = vpop.permute.xlu0 %1526
    %1528 = vrot.lane.b32.xlu0 %v1092, 48
    %v1529 = vpop.permute.xlu0 %1528
    %1530 = vrot.lane.b32.xlu0 %v1094, 48
    %v1531 = vpop.permute.xlu0 %1530
    %1532 = vrot.lane.b32.xlu0 %v1096, 48
    %v1533 = vpop.permute.xlu0 %1532
    %1534 = vrot.lane.b32.xlu0 %v1098, 48
    %v1535 = vpop.permute.xlu0 %1534
    %1536 = vrot.lane.b32.xlu0 %v1100, 48
    %v1537 = vpop.permute.xlu0 %1536
    %1538 = vrot.lane.b32.xlu0 %v1106, 48
    %v1539 = vpop.permute.xlu0 %1538
    %1540 = vrot.lane.b32.xlu0 %v1108, 48
    %v1541 = vpop.permute.xlu0 %1540
    %1542 = vrot.lane.b32.xlu0 %v1110, 48
    %v1543 = vpop.permute.xlu0 %1542
    %1544 = vrot.lane.b32.xlu0 %v1112, 48
    %v1545 = vpop.permute.xlu0 %1544
    %1546 = vrot.lane.b32.xlu0 %v1114, 48
    %v1547 = vpop.permute.xlu0 %1546
    %1548 = vrot.lane.b32.xlu0 %v1116, 48
    %v1549 = vpop.permute.xlu0 %1548
    %1550 = vrot.lane.b32.xlu0 %v1118, 48
    %v1551 = vpop.permute.xlu0 %1550
    %1552 = vrot.lane.b32.xlu0 %v1120, 48
    %v1553 = vpop.permute.xlu0 %1552
    %1570 = vrot.lane.b32.xlu0 %v1162, 56
    %v1571 = vpop.permute.xlu0 %1570
    %1572 = vrot.lane.b32.xlu0 %v1165, 56
    %v1573 = vpop.permute.xlu0 %1572
    %1574 = vrot.lane.b32.xlu0 %v1168, 56
    %v1575 = vpop.permute.xlu0 %1574
    %1576 = vrot.lane.b32.xlu0 %v1171, 56
    %v1577 = vpop.permute.xlu0 %1576
    %1578 = vrot.lane.b32.xlu0 %v1174, 56
    %v1579 = vpop.permute.xlu0 %1578
    %1580 = vrot.lane.b32.xlu0 %v1177, 56
    %v1581 = vpop.permute.xlu0 %1580
    %1582 = vrot.lane.b32.xlu0 %v1256, 56
    %v1583 = vpop.permute.xlu0 %1582
    %1584 = vrot.lane.b32.xlu0 %v1272, 56
    %v1585 = vpop.permute.xlu0 %1584
    %1586 = vrot.lane.b32.xlu0 %v1186, 56
    %v1587 = vpop.permute.xlu0 %1586
    %1588 = vrot.lane.b32.xlu0 %v1189, 56
    %v1589 = vpop.permute.xlu0 %1588
    %1590 = vrot.lane.b32.xlu0 %v1192, 56
    %v1591 = vpop.permute.xlu0 %1590
    %1592 = vrot.lane.b32.xlu0 %v1195, 56
    %v1593 = vpop.permute.xlu0 %1592
    %1594 = vrot.lane.b32.xlu0 %v1198, 56
    %v1595 = vpop.permute.xlu0 %1594
    %1596 = vrot.lane.b32.xlu0 %v1201, 56
    %v1597 = vpop.permute.xlu0 %1596
    %1598 = vrot.lane.b32.xlu0 %v1259, 56
    %v1599 = vpop.permute.xlu0 %1598
    %1600 = vrot.lane.b32.xlu0 %v1275, 56
    %v1601 = vpop.permute.xlu0 %1600
    %1618 = vrot.lane.b32.xlu0 %v1210, 64
    %v1619 = vpop.permute.xlu0 %1618
    %1620 = vrot.lane.b32.xlu0 %v1213, 64
    %v1621 = vpop.permute.xlu0 %1620
    %1622 = vrot.lane.b32.xlu0 %v1216, 64
    %v1623 = vpop.permute.xlu0 %1622
    %1624 = vrot.lane.b32.xlu0 %v1219, 64
    %v1625 = vpop.permute.xlu0 %1624
    %1626 = vrot.lane.b32.xlu0 %v1222, 64
    %v1627 = vpop.permute.xlu0 %1626
    %1628 = vrot.lane.b32.xlu0 %v1225, 64
    %v1629 = vpop.permute.xlu0 %1628
    %1630 = vrot.lane.b32.xlu0 %v1262, 64
    %v1631 = vpop.permute.xlu0 %1630
    %1632 = vrot.lane.b32.xlu0 %v1278, 64
    %v1633 = vpop.permute.xlu0 %1632
    %1634 = vrot.lane.b32.xlu0 %v1234, 64
    %v1635 = vpop.permute.xlu0 %1634
    %1636 = vrot.lane.b32.xlu0 %v1237, 64
    %v1637 = vpop.permute.xlu0 %1636
    %1638 = vrot.lane.b32.xlu0 %v1240, 64
    %v1639 = vpop.permute.xlu0 %1638
    %1640 = vrot.lane.b32.xlu0 %v1243, 64
    %v1641 = vpop.permute.xlu0 %1640
    %1642 = vrot.lane.b32.xlu0 %v1246, 64
    %v1643 = vpop.permute.xlu0 %1642
    %1644 = vrot.lane.b32.xlu0 %v1249, 64
    %v1645 = vpop.permute.xlu0 %1644
    %1646 = vrot.lane.b32.xlu0 %v1265, 64
    %v1647 = vpop.permute.xlu0 %1646
    %1648 = vrot.lane.b32.xlu0 %v1281, 64
    %v1649 = vpop.permute.xlu0 %1648
    %v1666 = vsel %vm652, %v1082, %v1283
    %v1667 = vsel %vm652, %v1084, %v1285
    %v1668 = vsel %vm652, %v1086, %v1287
    %v1669 = vsel %vm652, %v1088, %v1289
    %v1670 = vsel %vm652, %v1090, %v1291
    %v1671 = vsel %vm652, %v1092, %v1293
    %v1672 = vsel %vm652, %v1094, %v1295
    %v1673 = vsel %vm652, %v1096, %v1297
    %v1674 = vsel %vm652, %v1102, %v1299
    %v1675 = vsel %vm652, %v1104, %v1301
    %v1676 = vsel %vm652, %v1106, %v1303
    %v1677 = vsel %vm652, %v1108, %v1305
    %v1678 = vsel %vm652, %v1110, %v1307
    %v1679 = vsel %vm652, %v1112, %v1309
    %v1680 = vsel %vm652, %v1114, %v1311
    %v1681 = vsel %vm652, %v1116, %v1313
    %v1682 = vsel %vm669, %v1666, %v1331
    %v1683 = vsel %vm669, %v1667, %v1333
    %v1684 = vsel %vm669, %v1668, %v1335
    %v1685 = vsel %vm669, %v1669, %v1337
    %v1686 = vsel %vm669, %v1670, %v1339
    %v1687 = vsel %vm669, %v1671, %v1341
    %v1688 = vsel %vm669, %v1672, %v1343
    %v1689 = vsel %vm669, %v1673, %v1345
    %v1690 = vsel %vm669, %v1674, %v1347
    %v1691 = vsel %vm669, %v1675, %v1349
    %v1692 = vsel %vm669, %v1676, %v1351
    %v1693 = vsel %vm669, %v1677, %v1353
    %v1694 = vsel %vm669, %v1678, %v1355
    %v1695 = vsel %vm669, %v1679, %v1357
    %v1696 = vsel %vm669, %v1680, %v1359
    %v1697 = vsel %vm669, %v1681, %v1361
    %v1698 = vsel %vm686, %v1682, %v1379
    %v1699 = vsel %vm686, %v1683, %v1381
    %v1700 = vsel %vm686, %v1684, %v1383
    %v1701 = vsel %vm686, %v1685, %v1385
    %v1702 = vsel %vm686, %v1686, %v1387
    %v1703 = vsel %vm686, %v1687, %v1389
    %v1704 = vsel %vm686, %v1688, %v1391
    %v1705 = vsel %vm686, %v1689, %v1393
    %v1706 = vsel %vm686, %v1690, %v1395
    %v1707 = vsel %vm686, %v1691, %v1397
    %v1708 = vsel %vm686, %v1692, %v1399
    %v1709 = vsel %vm686, %v1693, %v1401
    %v1710 = vsel %vm686, %v1694, %v1403
    %v1711 = vsel %vm686, %v1695, %v1405
    %v1712 = vsel %vm686, %v1696, %v1407
    %v1713 = vsel %vm686, %v1697, %v1409
    %v1714 = vsel %vm703, %v1698, %v1427
    %v1715 = vsel %vm703, %v1699, %v1429
    %v1716 = vsel %vm703, %v1700, %v1431
    %v1717 = vsel %vm703, %v1701, %v1433
    %v1718 = vsel %vm703, %v1702, %v1435
    %v1719 = vsel %vm703, %v1703, %v1437
    %v1720 = vsel %vm703, %v1704, %v1439
    %v1721 = vsel %vm703, %v1705, %v1441
    %v1722 = vsel %vm703, %v1706, %v1443
    %v1723 = vsel %vm703, %v1707, %v1445
    %v1724 = vsel %vm703, %v1708, %v1447
    %v1725 = vsel %vm703, %v1709, %v1449
    %v1726 = vsel %vm703, %v1710, %v1451
    %v1727 = vsel %vm703, %v1711, %v1453
    %v1728 = vsel %vm703, %v1712, %v1455
    %v1729 = vsel %vm703, %v1713, %v1457
    %v1730 = vsel %vm720, %v1714, %v1475
    %v1731 = vsel %vm720, %v1715, %v1477
    %v1732 = vsel %vm720, %v1716, %v1479
    %v1733 = vsel %vm720, %v1717, %v1481
    %v1734 = vsel %vm720, %v1718, %v1483
    %v1735 = vsel %vm720, %v1719, %v1485
    %v1736 = vsel %vm720, %v1720, %v1487
    %v1737 = vsel %vm720, %v1721, %v1489
    %v1738 = vsel %vm720, %v1722, %v1491
    %v1739 = vsel %vm720, %v1723, %v1493
    %v1740 = vsel %vm720, %v1724, %v1495
    %v1741 = vsel %vm720, %v1725, %v1497
    %v1742 = vsel %vm720, %v1726, %v1499
    %v1743 = vsel %vm720, %v1727, %v1501
    %v1744 = vsel %vm720, %v1728, %v1503
    %v1745 = vsel %vm720, %v1729, %v1505
    %v1746 = vsel %vm737, %v1730, %v1523
    %v1747 = vsel %vm737, %v1731, %v1525
    %v1748 = vsel %vm737, %v1732, %v1527
    %v1749 = vsel %vm737, %v1733, %v1529
    %v1750 = vsel %vm737, %v1734, %v1531
    %v1751 = vsel %vm737, %v1735, %v1533
    %v1752 = vsel %vm737, %v1736, %v1535
    %v1753 = vsel %vm737, %v1737, %v1537
    %v1754 = vsel %vm737, %v1738, %v1539
    %v1755 = vsel %vm737, %v1739, %v1541
    %v1756 = vsel %vm737, %v1740, %v1543
    %v1757 = vsel %vm737, %v1741, %v1545
    %v1758 = vsel %vm737, %v1742, %v1547
    %v1759 = vsel %vm737, %v1743, %v1549
    %v1760 = vsel %vm737, %v1744, %v1551
    %v1761 = vsel %vm737, %v1745, %v1553
    %v1762 = vsel %vm754, %v1746, %v1571
    %v1763 = vsel %vm754, %v1747, %v1573
    %v1764 = vsel %vm754, %v1748, %v1575
    %v1765 = vsel %vm754, %v1749, %v1577
    %v1766 = vsel %vm754, %v1750, %v1579
    %v1767 = vsel %vm754, %v1751, %v1581
    %v1768 = vsel %vm754, %v1752, %v1583
    %v1769 = vsel %vm754, %v1753, %v1585
    %v1770 = vsel %vm754, %v1754, %v1587
    %v1771 = vsel %vm754, %v1755, %v1589
    %v1772 = vsel %vm754, %v1756, %v1591
    %v1773 = vsel %vm754, %v1757, %v1593
    %v1774 = vsel %vm754, %v1758, %v1595
    %v1775 = vsel %vm754, %v1759, %v1597
    %v1776 = vsel %vm754, %v1760, %v1599
    %v1777 = vsel %vm754, %v1761, %v1601
    %v1778 = vsel %vm771, %v1762, %v1619
    %v1779 = vsel %vm771, %v1763, %v1621
    %v1780 = vsel %vm771, %v1764, %v1623
    %v1781 = vsel %vm771, %v1765, %v1625
    %v1782 = vsel %vm771, %v1766, %v1627
    %v1783 = vsel %vm771, %v1767, %v1629
    %v1784 = vsel %vm771, %v1768, %v1631
    %v1785 = vsel %vm771, %v1769, %v1633
    %v1786 = vsel %vm771, %v1770, %v1635
    %v1787 = vsel %vm771, %v1771, %v1637
    %v1788 = vsel %vm771, %v1772, %v1639
    %v1789 = vsel %vm771, %v1773, %v1641
    %v1790 = vsel %vm771, %v1774, %v1643
    %v1791 = vsel %vm771, %v1775, %v1645
    %v1792 = vsel %vm771, %v1776, %v1647
    %v1793 = vsel %vm771, %v1777, %v1649
    %v1794 = vpack.c.bf16 %v1779, %v1778
    %v1795 = vpack.c.bf16 %v1781, %v1780
    %v1796 = vpack.c.bf16 %v1783, %v1782
    %v1797 = vpack.c.bf16 %v1785, %v1784
    %v1798 = vpack.c.bf16 %v1787, %v1786
    %v1799 = vpack.c.bf16 %v1789, %v1788
    %v1800 = vpack.c.bf16 %v1791, %v1790
    %v1801 = vpack.c.bf16 %v1793, %v1792
    %v1802 = vld [vmem:[%s3] sm:$0xf]
    %v1803 = vld [vmem:[%s3 + $0x4] sm:$0xf]
    %v1804 = vld [vmem:[%s3 + $0x8] sm:$0xf]
    %v1805 = vld [vmem:[%s3 + $0xc] sm:$0xf]
    %v1806 = vld [vmem:[%s3 + $0x10] sm:$0xf]
    %v1807 = vld [vmem:[%s3 + $0x14] sm:$0xf]
    %v1808 = vld [vmem:[%s3 + $0x18] sm:$0xf]
    %v1809 = vld [vmem:[%s3 + $0x1c] sm:$0xf]
    %v1810 = vld [vmem:[%s3 + $0x20] sm:$0xf]
    %v1820 = vunpack.c.l.b16 %v1802
    %v1821 = vunpack.c.l.b16 %v1803
    %v1822 = vunpack.c.l.b16 %v1804
    %v1823 = vunpack.c.l.b16 %v1805
    %v1824 = vunpack.c.l.b16 %v1806
    %v1825 = vunpack.c.l.b16 %v1807
    %v1826 = vunpack.c.l.b16 %v1808
    %v1827 = vunpack.c.l.b16 %v1809
    %v1828 = vunpack.c.l.b16 %v1810
    %v1829 = vpack.c.b16 %v1821, %v1820
    %v1830 = vpack.c.b16 %v1823, %v1822
    %v1831 = vpack.c.b16 %v1825, %v1824
    %v1832 = vpack.c.b16 %v1827, %v1826
    %v1833 = vpack.c.b16 %v1828, %v1828
    %v1839 = vsel %vm832, %v1794, 0
    %v1842 = vsel %vm832, %v1795, 0
    %v1845 = vsel %vm832, %v1796, 0
    %v1848 = vsel %vm832, %v1797, 0
    %v1851 = vsel %vm832, %v1798, 0
    %v1854 = vsel %vm832, %v1799, 0
    %v1857 = vsel %vm832, %v1800, 0
    %v1860 = vsel %vm832, %v1801, 0
    %v1863 = vsel %vm857, %v1833, 0
    %1865 = vmatprep.subr.bf16.mxu0 0
    %1866 = vmatpush1.bf16.msra.mxu0 %v1829
    %1867 = vmatprep.subr.bf16.mxu0 0
    %1868 = vmatpush1.bf16.msra.mxu0 %v1830
    %1869 = vmatprep.subr.bf16.mxu0 0
    %1870 = vmatpush1.bf16.msra.mxu0 %v1831
    %1871 = vmatprep.subr.bf16.mxu0 0
    %1872 = vmatpush1.bf16.msra.mxu0 %v1832
    %1873 = vmatprep.subr.bf16.mxu0 0
    %1874 = vmatpush1.bf16.msra.mxu0 %v1863
    %1875 = vmatprep.subr.bf16.mxu0 0
    %1876 = vmatpush1.bf16.msra.mxu0 0
    %1877 = vmatprep.subr.bf16.mxu0 0
    %1878 = vmatpush1.bf16.msra.mxu0 0
    %1879 = vmatprep.subr.bf16.mxu0 0
    %1880 = vmatpush1.bf16.msra.mxu0 0
    %1881 = vmatprep.subr.bf16.mxu0 0
    %1882 = vmatpush1.bf16.msra.mxu0 0
    %1883 = vmatprep.subr.bf16.mxu0 0
    %1884 = vmatpush1.bf16.msra.mxu0 0
    %1885 = vmatprep.subr.bf16.mxu0 0
    %1886 = vmatpush1.bf16.msra.mxu0 0
    %1887 = vmatprep.subr.bf16.mxu0 0
    %1888 = vmatpush1.bf16.msra.mxu0 0
    %1889 = vmatprep.subr.bf16.mxu0 0
    %1890 = vmatpush1.bf16.msra.mxu0 0
    %1891 = vmatprep.subr.bf16.mxu0 0
    %1892 = vmatpush1.bf16.msra.mxu0 0
    %1893 = vmatprep.subr.bf16.mxu0 0
    %1894 = vmatpush1.bf16.msra.mxu0 0
    %1895 = vmatprep.subr.bf16.mxu0 0
    %1896 = vmatpush1.bf16.msra.mxu0 0
    %1897 = vmatprep.mubr.bf16.mxu0 0
    %1898 = vmatmul.mubr.bf16.gmra.mrb[0].mxu0 %v1839
    %v1899 = vpop.f32.mrb[0].mxu0
    %v1900 = vadd.f32 0.0, %v1899
    %v1901 = vpop.f32.mrb[0].mxu0
    %v1902 = vpop.f32.mrb[0].mxu0
    %v1903 = vadd.f32 0.0, %v1902
    %v1904 = vpop.f32.mrb[0].mxu0
    %1905 = vmatprep.mubr.bf16.mxu0 0
    %1906 = vmatmul.mubr.bf16.gmra.mrb[0].mxu0 %v1842
    %v1907 = vpop.f32.mrb[0].mxu0
    %v1908 = vadd.f32 0.0, %v1907
    %v1909 = vpop.f32.mrb[0].mxu0
    %v1910 = vpop.f32.mrb[0].mxu0
    %v1911 = vadd.f32 0.0, %v1910
    %v1912 = vpop.f32.mrb[0].mxu0
    %1913 = vmatprep.mubr.bf16.mxu0 0
    %1914 = vmatmul.mubr.bf16.gmra.mrb[0].mxu0 %v1845
    %v1915 = vpop.f32.mrb[0].mxu0
    %v1916 = vadd.f32 0.0, %v1915
    %v1917 = vpop.f32.mrb[0].mxu0
    %v1918 = vpop.f32.mrb[0].mxu0
    %v1919 = vadd.f32 0.0, %v1918
    %v1920 = vpop.f32.mrb[0].mxu0
    %1921 = vmatprep.mubr.bf16.mxu0 0
    %1922 = vmatmul.mubr.bf16.gmra.mrb[0].mxu0 %v1848
    %v1923 = vpop.f32.mrb[0].mxu0
    %v1924 = vadd.f32 0.0, %v1923
    %v1925 = vpop.f32.mrb[0].mxu0
    %v1926 = vpop.f32.mrb[0].mxu0
    %v1927 = vadd.f32 0.0, %v1926
    %v1928 = vpop.f32.mrb[0].mxu0
    %1929 = vmatprep.mubr.bf16.mxu0 0
    %1930 = vmatmul.mubr.bf16.gmra.mrb[0].mxu0 %v1851
    %v1931 = vpop.f32.mrb[0].mxu0
    %v1932 = vadd.f32 0.0, %v1931
    %v1933 = vpop.f32.mrb[0].mxu0
    %v1934 = vpop.f32.mrb[0].mxu0
    %v1935 = vadd.f32 0.0, %v1934
    %v1936 = vpop.f32.mrb[0].mxu0
    %1937 = vmatprep.mubr.bf16.mxu0 0
    %1938 = vmatmul.mubr.bf16.gmra.mrb[0].mxu0 %v1854
    %v1939 = vpop.f32.mrb[0].mxu0
    %v1940 = vadd.f32 0.0, %v1939
    %v1941 = vpop.f32.mrb[0].mxu0
    %v1942 = vpop.f32.mrb[0].mxu0
    %v1943 = vadd.f32 0.0, %v1942
    %v1944 = vpop.f32.mrb[0].mxu0
    %1945 = vmatprep.mubr.bf16.mxu0 0
    %1946 = vmatmul.mubr.bf16.gmra.mrb[0].mxu0 %v1857
    %v1947 = vpop.f32.mrb[0].mxu0
    %v1948 = vadd.f32 0.0, %v1947
    %v1949 = vpop.f32.mrb[0].mxu0
    %v1950 = vpop.f32.mrb[0].mxu0
    %v1951 = vadd.f32 0.0, %v1950
    %v1952 = vpop.f32.mrb[0].mxu0
    %1953 = vmatprep.mubr.bf16.mxu0 0
    %1954 = vmatmul.mubr.bf16.gmra.mrb[0].mxu0 %v1860
    %v1955 = vpop.f32.mrb[0].mxu0
    %v1956 = vadd.f32 0.0, %v1955
    %v1957 = vpop.f32.mrb[0].mxu0
    %v1958 = vpop.f32.mrb[0].mxu0
    %v1959 = vadd.f32 0.0, %v1958
    %v1960 = vpop.f32.mrb[0].mxu0
    %1961 = vdwg.mxu0
    %v1962 = vlaneseq
    %v1963 = vshrl.u32 %v1962, 7
    %v1964 = vsub.s32 0, %v1963
    %v1965 = vrot.slane %v24, %v1964
    %v1966 = vmul.f32 %v1900, %v1965
    %v1967 = vmul.f32 %v1903, %v1965
    %v1968 = vmul.f32 %v1908, %v1965
    %v1969 = vmul.f32 %v1911, %v1965
    %v1970 = vmul.f32 %v1916, %v1965
    %v1971 = vmul.f32 %v1919, %v1965
    %v1972 = vmul.f32 %v1924, %v1965
    %v1973 = vmul.f32 %v1927, %v1965
    %v1974 = vmul.f32 %v1932, %v1965
    %v1975 = vmul.f32 %v1935, %v1965
    %v1976 = vmul.f32 %v1940, %v1965
    %v1977 = vmul.f32 %v1943, %v1965
    %v1978 = vmul.f32 %v1948, %v1965
    %v1979 = vmul.f32 %v1951, %v1965
    %v1980 = vmul.f32 %v1956, %v1965
    %v1981 = vmul.f32 %v1959, %v1965
    %v1982 = vlaneseq
    %v1983 = vshrl.u32 %v1982, 7
    %v1984 = vsub.s32 0, %v1983
    %v1985 = vrot.slane %v25, %v1984
    %v1986 = vadd.f32 %v1966, %v1985
    %v1987 = vadd.f32 %v1967, %v1985
    %v1988 = vadd.f32 %v1968, %v1985
    %v1989 = vadd.f32 %v1969, %v1985
    %v1990 = vadd.f32 %v1970, %v1985
    %v1991 = vadd.f32 %v1971, %v1985
    %v1992 = vadd.f32 %v1972, %v1985
    %v1993 = vadd.f32 %v1973, %v1985
    %v1994 = vadd.f32 %v1974, %v1985
    %v1995 = vadd.f32 %v1975, %v1985
    %v1996 = vadd.f32 %v1976, %v1985
    %v1997 = vadd.f32 %v1977, %v1985
    %v1998 = vadd.f32 %v1978, %v1985
    %v1999 = vadd.f32 %v1979, %v1985
    %v2000 = vadd.f32 %v1980, %v1985
    %v2001 = vadd.f32 %v1981, %v1985
    %v2002 = vld [vmem:[%s1] sm:$0xff]
    %v2003 = vld [vmem:[%s1 + $0x8] sm:$0xff]
    %v2004 = vld [vmem:[%s1 + $0x10] sm:$0xff]
    %v2005 = vld [vmem:[%s1 + $0x18] sm:$0xff]
    %v2006 = vld [vmem:[%s1 + $0x20] sm:$0xff]
    %v2007 = vld [vmem:[%s1 + $0x28] sm:$0xff]
    %v2008 = vld [vmem:[%s1 + $0x30] sm:$0xff]
    %v2009 = vld [vmem:[%s1 + $0x38] sm:$0xff]
    %v2010 = vld [vmem:[%s1 + $0x40] sm:$0xff]
    %v2011 = vld [vmem:[%s1 + $0x48] sm:$0xff]
    %v2012 = vld [vmem:[%s1 + $0x50] sm:$0xff]
    %v2013 = vld [vmem:[%s1 + $0x58] sm:$0xff]
    %v2014 = vld [vmem:[%s1 + $0x60] sm:$0xff]
    %v2015 = vld [vmem:[%s1 + $0x68] sm:$0xff]
    %v2016 = vld [vmem:[%s1 + $0x70] sm:$0xff]
    %v2017 = vld [vmem:[%s1 + $0x78] sm:$0xff]
    %v2018 = vadd.f32 %v1986, %v2002
    %v2019 = vadd.f32 %v1987, %v2003
    %v2020 = vadd.f32 %v1988, %v2004
    %v2021 = vadd.f32 %v1989, %v2005
    %v2022 = vadd.f32 %v1990, %v2006
    %v2023 = vadd.f32 %v1991, %v2007
    %v2024 = vadd.f32 %v1992, %v2008
    %v2025 = vadd.f32 %v1993, %v2009
    %v2026 = vadd.f32 %v1994, %v2010
    %v2027 = vadd.f32 %v1995, %v2011
    %v2028 = vadd.f32 %v1996, %v2012
    %v2029 = vadd.f32 %v1997, %v2013
    %v2030 = vadd.f32 %v1998, %v2014
    %v2031 = vadd.f32 %v1999, %v2015
    %v2032 = vadd.f32 %v2000, %v2016
    %v2033 = vadd.f32 %v2001, %v2017
    %v2034 = vmax.f32 %v2018, 0.0
    %v2035 = vmax.f32 %v2019, 0.0
    %v2036 = vmax.f32 %v2020, 0.0
    %v2037 = vmax.f32 %v2021, 0.0
    %v2038 = vmax.f32 %v2022, 0.0
    %v2039 = vmax.f32 %v2023, 0.0
    %v2040 = vmax.f32 %v2024, 0.0
    %v2041 = vmax.f32 %v2025, 0.0
    %v2042 = vmax.f32 %v2026, 0.0
    %v2043 = vmax.f32 %v2027, 0.0
    %v2044 = vmax.f32 %v2028, 0.0
    %v2045 = vmax.f32 %v2029, 0.0
    %v2046 = vmax.f32 %v2030, 0.0
    %v2047 = vmax.f32 %v2031, 0.0
    %v2048 = vmax.f32 %v2032, 0.0
    %v2049 = vmax.f32 %v2033, 0.0
    %2050 = vst.msk [vmem:[#allocation3] sm:$0xff] %vm652, %v2034
    %2051 = vst.msk [vmem:[#allocation3 + $0x8] sm:$0xff] %vm652, %v2035
    %2052 = vst.msk [vmem:[#allocation3 + $0x10] sm:$0xff] %vm652, %v2036
    %2053 = vst.msk [vmem:[#allocation3 + $0x18] sm:$0xff] %vm652, %v2037
    %2054 = vst.msk [vmem:[#allocation3 + $0x20] sm:$0xff] %vm652, %v2038
    %2055 = vst.msk [vmem:[#allocation3 + $0x28] sm:$0xff] %vm652, %v2039
    %2056 = vst.msk [vmem:[#allocation3 + $0x30] sm:$0xff] %vm652, %v2040
    %2057 = vst.msk [vmem:[#allocation3 + $0x38] sm:$0xff] %vm652, %v2041
    %2058 = vst.msk [vmem:[#allocation3 + $0x40] sm:$0xff] %vm652, %v2042
    %2059 = vst.msk [vmem:[#allocation3 + $0x48] sm:$0xff] %vm652, %v2043
    %2060 = vst.msk [vmem:[#allocation3 + $0x50] sm:$0xff] %vm652, %v2044
    %2061 = vst.msk [vmem:[#allocation3 + $0x58] sm:$0xff] %vm652, %v2045
    %2062 = vst.msk [vmem:[#allocation3 + $0x60] sm:$0xff] %vm652, %v2046
    %2063 = vst.msk [vmem:[#allocation3 + $0x68] sm:$0xff] %vm652, %v2047
    %2064 = vst.msk [vmem:[#allocation3 + $0x70] sm:$0xff] %vm652, %v2048
    %2065 = vst.msk [vmem:[#allocation3 + $0x78] sm:$0xff] %vm652, %v2049
    // Predicated region
    $region22: #{tpu_custom_call.1} parent=1 // pred_check
      _
    $region23: #{tpu_custom_call.1} parent=1 // pred_check_branch
      %2067 = sbr.rel (0) target = $region25
    $region24: #{tpu_custom_call.1} parent=1 // pred_region
      %s2069 = ssub.s32 2048, 2048
      %2070 = vsyncadd [#allocation4], %s2069
      %s2071 = sshll.u32 [#allocation3], 4
      %s2072 = int_to_ptr.vmem [resolvable:$true] %s2071
      %2077 = dma.vmem_to_hbm [thread:$0]  %s2072, 2048, %s5, [#allocation4], 128, 128, 8
    $region25: #{tpu_custom_call.1} parent=1 // pred_fallthru
      _
    // Predicated region
    $region26: #{tpu_custom_call.1} parent=1 // pred_check
      _
    $region27: #{tpu_custom_call.1} parent=1 // pred_check_branch
      %2079 = sbr.rel (0) target = $region29
    $region28: #{tpu_custom_call.1} parent=1 // pred_region
      %2080 = dma.done [#allocation4], 2048
    $region29: #{tpu_custom_call.1} parent=1 // pred_fallthru
      _
    %2081 = vsyncpa [#allocation4], 1

</llo_original>
